<compile_context>
chip_gen: v5e
topology: v5e:2x2
jax: 0.10.0
libtpu: 0.0.40
codegen_flags: <defaults>
</compile_context>

<pallas_src>
import functools

import jax
import jax.numpy as jnp
from jax import lax
from jax.experimental import pallas as pl
from jax.experimental.pallas import tpu as pltpu

EPS = 1e-5  # PyTorch BatchNorm3d default eps


# ---------------------------------------------------------------------------
# Fused kernel: one batch element per grid step.
#   x_ref      : (1, C, S)   input voxels, S = D*H*W on lanes
#   scale/shift: (C, 1)      folded BatchNorm affine (running stats)
#   w1/b1      : (C, C)/(C,1)  1x1x1 conv as channel matmul
#   w2/b2      : (G, KP)/(G,1) 3x3x3 conv weights in im2col order, K padded to KP
#   pos_ref    : (3, S)      (d, h, w) coordinate of every flattened voxel
#   o_ref      : (1, G, S)   output (NCDHW-flat)
#   im2col_ref : (KP, S)     VMEM scratch im2col slab
# ---------------------------------------------------------------------------
def _dense_layer_kernel(x_ref, scale_ref, shift_ref, w1_ref, b1_ref,
                        w2_ref, b2_ref, pos_ref, o_ref, im2col_ref,
                        *, C, G, D, H, W, S, K, KP):
    x = x_ref[0]                               # (C, S)
    bn_scale = scale_ref[...]                  # (C, 1)
    bn_shift = shift_ref[...]                  # (C, 1)

    # ---- stage 1: BN -> ReLU -> 1x1x1 conv -> BN(same params) -> ReLU ----
    h = jnp.maximum(x * bn_scale + bn_shift, 0.0)
    y = jnp.dot(w1_ref[...], h, preferred_element_type=jnp.float32) + b1_ref[...]
    a = jnp.maximum(y * bn_scale + bn_shift, 0.0)          # (C, S)

    # ---- stage 2: 3x3x3 SAME conv = one K=27*C matmul over an im2col slab ----
    pos = pos_ref[...]                         # (3, S) int32
    d_idx = pos[0:1, :]
    h_idx = pos[1:2, :]
    w_idx = pos[2:3, :]

    # Zero the K-padding rows once per step (never overwritten by the taps).
    if KP > K:
        im2col_ref[K:KP, :] = jnp.zeros((KP - K, S), jnp.float32)

    tap = 0
    for kd in (-1, 0, 1):
        for kh in (-1, 0, 1):
            for kw in (-1, 0, 1):
                off = kd * H * W + kh * W + kw
                # Shift only along the flattened lane axis (XLU roll, no slab copy).
                shifted = a if off == 0 else pltpu.roll(a, shift=(-off) % S, axis=1)
                # Mask voxels whose neighbour falls outside the volume (SAME zero pad;
                # also kills the roll wrap-around).
                conds = []
                if kd == -1:
                    conds.append(d_idx >= 1)
                elif kd == 1:
                    conds.append(d_idx <= D - 2)
                if kh == -1:
                    conds.append(h_idx >= 1)
                elif kh == 1:
                    conds.append(h_idx <= H - 2)
                if kw == -1:
                    conds.append(w_idx >= 1)
                elif kw == 1:
                    conds.append(w_idx <= W - 2)
                if conds:
                    valid = conds[0]
                    for cnd in conds[1:]:
                        valid = jnp.logical_and(valid, cnd)
                    shifted = jnp.where(valid, shifted, 0.0)
                im2col_ref[tap * C:(tap + 1) * C, :] = shifted
                tap += 1

    out = jnp.dot(w2_ref[...], im2col_ref[...],
                  preferred_element_type=jnp.float32) + b2_ref[...]   # (G, S)
    # Dropout(p=0.2) is identity in eval mode.
    o_ref[...] = out.reshape(1, G, S)


# ---------------------------------------------------------------------------
# Wrapper: no transposes, no jnp.pad — only free reshapes and tiny weight prep.
# ---------------------------------------------------------------------------
def dense_layer_forward(x_ncdhw, params):
    gamma, beta, run_mean, run_var, w1, b1, w2, b2 = params
    N, C, D, H, W = x_ncdhw.shape
    G = w2.shape[0]
    S = D * H * W
    K = 27 * C
    KP = ((K + 127) // 128) * 128              # pad contraction dim to lane tile

    x3 = x_ncdhw.reshape(N, C, S).astype(jnp.float32)   # NCDHW is already (N, C, DHW)

    inv_std = 1.0 / jnp.sqrt(run_var.astype(jnp.float32) + EPS)
    bn_scale = (gamma * inv_std).reshape(C, 1).astype(jnp.float32)
    bn_shift = (beta - run_mean * gamma * inv_std).reshape(C, 1).astype(jnp.float32)
    w1m = w1.reshape(C, C).astype(jnp.float32)           # y = w1m @ h
    b1c = b1.reshape(C, 1).astype(jnp.float32)

    # (G, C, 3, 3, 3) -> (G, 27*C) with column index ((kd*3+kh)*3+kw)*C + c, zero-padded.
    w2m = jnp.transpose(w2, (0, 2, 3, 4, 1)).reshape(G, K).astype(jnp.float32)
    w2m = jnp.pad(w2m, ((0, 0), (0, KP - K)))
    b2c = b2.reshape(G, 1).astype(jnp.float32)

    # (d, h, w) coordinate of every flattened voxel, for the SAME-padding masks.
    s_iota = jnp.arange(S, dtype=jnp.int32)
    pos = jnp.stack([s_iota // (H * W), (s_iota // W) % H, s_iota % W], axis=0)

    kernel = functools.partial(_dense_layer_kernel, C=C, G=G, D=D, H=H, W=W,
                               S=S, K=K, KP=KP)

    out3 = pl.pallas_call(
        kernel,
        out_shape=jax.ShapeDtypeStruct((N, G, S), jnp.float32),
        grid=(N,),
        in_specs=[
            pl.BlockSpec((1, C, S), lambda n: (n, 0, 0)),   # x: one batch element
            pl.BlockSpec((C, 1), lambda n: (0, 0)),          # BN scale
            pl.BlockSpec((C, 1), lambda n: (0, 0)),          # BN shift
            pl.BlockSpec((C, C), lambda n: (0, 0)),          # 1x1x1 conv weight
            pl.BlockSpec((C, 1), lambda n: (0, 0)),          # conv1 bias
            pl.BlockSpec((G, KP), lambda n: (0, 0)),         # 3x3x3 weight (im2col layout)
            pl.BlockSpec((G, 1), lambda n: (0, 0)),          # conv2 bias
            pl.BlockSpec((3, S), lambda n: (0, 0)),          # voxel coordinates
        ],
        out_specs=pl.BlockSpec((1, G, S), lambda n: (n, 0, 0)),
        scratch_shapes=[pltpu.VMEM((KP, S), jnp.float32)],   # im2col slab
        compiler_params=pltpu.CompilerParams(
            dimension_semantics=("parallel",),
            vmem_limit_bytes=32 * 1024 * 1024,
        ),
    )(x3, bn_scale, bn_shift, w1m, b1c, w2m, b2c, pos)

    return out3.reshape(N, G, D, H, W)         # already NCDHW-flat: no transpose


# ---------------------------------------------------------------------------
# Pure-JAX reference (same inference-mode semantics) for the correctness check.
# ---------------------------------------------------------------------------
def dense_layer_reference(x_ncdhw, params):
    gamma, beta, run_mean, run_var, w1, b1, w2, b2 = params
    N, C, D, H, W = x_ncdhw.shape
    inv_std = 1.0 / jnp.sqrt(run_var + EPS)
    scale = (gamma * inv_std).reshape(1, C, 1, 1, 1)
    shift = (beta - run_mean * gamma * inv_std).reshape(1, C, 1, 1, 1)
    h = jnp.maximum(x_ncdhw * scale + shift, 0.0)
    y = jnp.einsum("ncdhw,oc->nodhw", h, w1.reshape(C, C),
                   precision=lax.Precision.HIGHEST) + b1.reshape(1, C, 1, 1, 1)
    a = jnp.maximum(y * scale + shift, 0.0)
    out = lax.conv_general_dilated(
        a, w2, window_strides=(1, 1, 1),
        padding=((1, 1), (1, 1), (1, 1)),
        dimension_numbers=("NCDHW", "OIDHW", "NCDHW"),
        precision=lax.Precision.HIGHEST,
    ) + b2.reshape(1, -1, 1, 1, 1)
    return out


if __name__ == "__main__":
    # Small shapes consistent with the module: Conv3d -> 5D input NCDHW.
    N, C, G = 2, 4, 8          # batch, in_channels, growth_rate
    D = H = W = 8

    key = jax.random.PRNGKey(0)
    ks = jax.random.split(key, 9)
    x = jax.random.normal(ks[0], (N, C, D, H, W), jnp.float32)

    gamma = jax.random.uniform(ks[1], (C,), jnp.float32, 0.5, 1.5)
    beta = jax.random.normal(ks[2], (C,), jnp.float32) * 0.1
    run_mean = jax.random.normal(ks[3], (C,), jnp.float32) * 0.1
    run_var = jax.random.uniform(ks[4], (C,), jnp.float32, 0.5, 1.5)
    w1 = jax.random.normal(ks[5], (C, C, 1, 1, 1), jnp.float32) * 0.2   # Conv3d(C, C, 1)
    b1 = jax.random.normal(ks[6], (C,), jnp.float32) * 0.1
    w2 = jax.random.normal(ks[7], (G, C, 3, 3, 3), jnp.float32) * 0.1   # Conv3d(C, G, 3, pad 1)
    b2 = jax.random.normal(ks[8], (G,), jnp.float32) * 0.1

    params = (gamma, beta, run_mean, run_var, w1, b1, w2, b2)

    out = dense_layer_forward(x, params)
    out = jax.block_until_ready(out)

    ref = dense_layer_reference(x, params)
    assert out.shape == (N, G, D, H, W), out.shape
    assert jnp.allclose(out, ref, atol=1e-4, rtol=1e-4), float(jnp.abs(out - ref).max())

    print("KERNEL_OK")
</pallas_src>

<mosaic_0001>
module attributes {stable_mosaic.version = 11 : i64} {
  func.func @_dense_layer_kernel(%arg0: i32, %arg1: memref<1x4x512xf32, #tpu.memory_space<vmem>>, %arg2: memref<4x1xf32, #tpu.memory_space<vmem>>, %arg3: memref<4x1xf32, #tpu.memory_space<vmem>>, %arg4: memref<4x4xf32, #tpu.memory_space<vmem>>, %arg5: memref<4x1xf32, #tpu.memory_space<vmem>>, %arg6: memref<8x128xf32, #tpu.memory_space<vmem>>, %arg7: memref<8x1xf32, #tpu.memory_space<vmem>>, %arg8: memref<3x512xi32, #tpu.memory_space<vmem>>, %arg9: memref<1x8x512xf32, #tpu.memory_space<vmem>>, %arg10: memref<128x512xf32, #tpu.memory_space<vmem>>) attributes {dimension_semantics = [#tpu.dimension_semantics<parallel>], iteration_bounds = array<i64: 2>, scalar_prefetch = 0 : i64, scratch_operands = 1 : i64, tpu.core_type = #tpu.core_type<tc>, window_params = [{transform_indices = @transform_0, window_bounds = array<i64: 1, 4, 512>}, {pipeline_mode = #tpu.pipeline_mode<synchronous>, transform_indices = @transform_1, window_bounds = array<i64: 4, 1>}, {pipeline_mode = #tpu.pipeline_mode<synchronous>, transform_indices = @transform_2, window_bounds = array<i64: 4, 1>}, {pipeline_mode = #tpu.pipeline_mode<synchronous>, transform_indices = @transform_3, window_bounds = array<i64: 4, 4>}, {pipeline_mode = #tpu.pipeline_mode<synchronous>, transform_indices = @transform_4, window_bounds = array<i64: 4, 1>}, {pipeline_mode = #tpu.pipeline_mode<synchronous>, transform_indices = @transform_5, window_bounds = array<i64: 8, 128>}, {pipeline_mode = #tpu.pipeline_mode<synchronous>, transform_indices = @transform_6, window_bounds = array<i64: 8, 1>}, {pipeline_mode = #tpu.pipeline_mode<synchronous>, transform_indices = @transform_7, window_bounds = array<i64: 3, 512>}, {transform_indices = @transform_8, window_bounds = array<i64: 1, 8, 512>}]} {
    %c0 = arith.constant 0 : index
    %c0_0 = arith.constant 0 : index
    %c0_1 = arith.constant 0 : index
    %0 = vector.load %arg1[%c0, %c0_0, %c0_1] : memref<1x4x512xf32, #tpu.memory_space<vmem>>, vector<1x4x512xf32>
    %1 = vector.shape_cast %0 : vector<1x4x512xf32> to vector<4x512xf32>
    %c0_2 = arith.constant 0 : index
    %c0_3 = arith.constant 0 : index
    %2 = vector.load %arg2[%c0_2, %c0_3] : memref<4x1xf32, #tpu.memory_space<vmem>>, vector<4x1xf32>
    %c0_4 = arith.constant 0 : index
    %c0_5 = arith.constant 0 : index
    %3 = vector.load %arg3[%c0_4, %c0_5] : memref<4x1xf32, #tpu.memory_space<vmem>>, vector<4x1xf32>
    %4 = vector.broadcast %2 : vector<4x1xf32> to vector<4x512xf32>
    %5 = arith.mulf %1, %4 : vector<4x512xf32>
    %6 = vector.broadcast %3 : vector<4x1xf32> to vector<4x512xf32>
    %7 = arith.addf %5, %6 : vector<4x512xf32>
    %cst = arith.constant 0.000000e+00 : f32
    %8 = vector.broadcast %cst : f32 to vector<4x512xf32>
    %9 = arith.maximumf %7, %8 : vector<4x512xf32>
    %c0_6 = arith.constant 0 : index
    %c0_7 = arith.constant 0 : index
    %10 = vector.load %arg4[%c0_6, %c0_7] : memref<4x4xf32, #tpu.memory_space<vmem>>, vector<4x4xf32>
    %cst_8 = arith.constant dense<0.000000e+00> : vector<4x512xf32>
    %11 = tpu.matmul %10, %9, %cst_8 {dimension_numbers = #tpu.dot_dimension_numbers<[1], [0], [0], [1], [0, 0, 1, 1], [], []>} : vector<4x4xf32>, vector<4x512xf32>, vector<4x512xf32> -> vector<4x512xf32>
    %c0_9 = arith.constant 0 : index
    %c0_10 = arith.constant 0 : index
    %12 = vector.load %arg5[%c0_9, %c0_10] : memref<4x1xf32, #tpu.memory_space<vmem>>, vector<4x1xf32>
    %13 = vector.broadcast %12 : vector<4x1xf32> to vector<4x512xf32>
    %14 = arith.addf %11, %13 : vector<4x512xf32>
    %15 = vector.broadcast %2 : vector<4x1xf32> to vector<4x512xf32>
    %16 = arith.mulf %14, %15 : vector<4x512xf32>
    %17 = vector.broadcast %3 : vector<4x1xf32> to vector<4x512xf32>
    %18 = arith.addf %16, %17 : vector<4x512xf32>
    %cst_11 = arith.constant 0.000000e+00 : f32
    %19 = vector.broadcast %cst_11 : f32 to vector<4x512xf32>
    %20 = arith.maximumf %18, %19 : vector<4x512xf32>
    %c0_12 = arith.constant 0 : index
    %c0_13 = arith.constant 0 : index
    %21 = vector.load %arg8[%c0_12, %c0_13] : memref<3x512xi32, #tpu.memory_space<vmem>>, vector<3x512xi32>
    %22 = vector.extract_strided_slice %21 {offsets = [0, 0], sizes = [1, 512], strides = [1, 1]} : vector<3x512xi32> to vector<1x512xi32>
    %23 = vector.extract_strided_slice %21 {offsets = [1, 0], sizes = [1, 512], strides = [1, 1]} : vector<3x512xi32> to vector<1x512xi32>
    %24 = vector.extract_strided_slice %21 {offsets = [2, 0], sizes = [1, 512], strides = [1, 1]} : vector<3x512xi32> to vector<1x512xi32>
    %cst_14 = arith.constant 0.000000e+00 : f32
    %25 = vector.broadcast %cst_14 : f32 to vector<20x512xf32>
    %c108 = arith.constant 108 : index
    %c0_15 = arith.constant 0 : index
    %26 = vector.load %arg10[%c108, %c0_15] : memref<128x512xf32, #tpu.memory_space<vmem>>, vector<20x512xf32>
    tpu.vector_store %arg10[%c108, %c0_15], %25 {strides = array<i32>} : memref<128x512xf32, #tpu.memory_space<vmem>>, vector<20x512xf32>,
    %c73_i32 = arith.constant 73 : i32
    %27 = tpu.dynamic_rotate %20 by %c73_i32 dim 1 : vector<4x512xf32>, i32 -> vector<4x512xf32>
    %c1_i32 = arith.constant 1 : i32
    %28 = vector.broadcast %c1_i32 : i32 to vector<1x512xi32>
    %29 = arith.cmpi sge, %22, %28 : vector<1x512xi32>
    %c1_i32_16 = arith.constant 1 : i32
    %30 = vector.broadcast %c1_i32_16 : i32 to vector<1x512xi32>
    %31 = arith.cmpi sge, %23, %30 : vector<1x512xi32>
    %c1_i32_17 = arith.constant 1 : i32
    %32 = vector.broadcast %c1_i32_17 : i32 to vector<1x512xi32>
    %33 = arith.cmpi sge, %24, %32 : vector<1x512xi32>
    %34 = arith.andi %29, %31 : vector<1x512xi1>
    %35 = arith.andi %34, %33 : vector<1x512xi1>
    %cst_18 = arith.constant 0.000000e+00 : f32
    %36 = vector.shape_cast %35 : vector<1x512xi1> to vector<1x512xi1>
    %37 = vector.broadcast %36 : vector<1x512xi1> to vector<4x512xi1>
    %38 = vector.broadcast %cst_18 : f32 to vector<4x512xf32>
    %39 = arith.select %37, %27, %38 : vector<4x512xi1>, vector<4x512xf32>
    %c0_19 = arith.constant 0 : index
    %c0_20 = arith.constant 0 : index
    %40 = vector.load %arg10[%c0_19, %c0_20] : memref<128x512xf32, #tpu.memory_space<vmem>>, vector<4x512xf32>
    tpu.vector_store %arg10[%c0_19, %c0_20], %39 {strides = array<i32>} : memref<128x512xf32, #tpu.memory_space<vmem>>, vector<4x512xf32>,
    %c72_i32 = arith.constant 72 : i32
    %41 = tpu.dynamic_rotate %20 by %c72_i32 dim 1 : vector<4x512xf32>, i32 -> vector<4x512xf32>
    %c1_i32_21 = arith.constant 1 : i32
    %42 = vector.broadcast %c1_i32_21 : i32 to vector<1x512xi32>
    %43 = arith.cmpi sge, %22, %42 : vector<1x512xi32>
    %c1_i32_22 = arith.constant 1 : i32
    %44 = vector.broadcast %c1_i32_22 : i32 to vector<1x512xi32>
    %45 = arith.cmpi sge, %23, %44 : vector<1x512xi32>
    %46 = arith.andi %43, %45 : vector<1x512xi1>
    %cst_23 = arith.constant 0.000000e+00 : f32
    %47 = vector.shape_cast %46 : vector<1x512xi1> to vector<1x512xi1>
    %48 = vector.broadcast %47 : vector<1x512xi1> to vector<4x512xi1>
    %49 = vector.broadcast %cst_23 : f32 to vector<4x512xf32>
    %50 = arith.select %48, %41, %49 : vector<4x512xi1>, vector<4x512xf32>
    %c4 = arith.constant 4 : index
    %c0_24 = arith.constant 0 : index
    %51 = vector.load %arg10[%c4, %c0_24] : memref<128x512xf32, #tpu.memory_space<vmem>>, vector<4x512xf32>
    tpu.vector_store %arg10[%c4, %c0_24], %50 {strides = array<i32>} : memref<128x512xf32, #tpu.memory_space<vmem>>, vector<4x512xf32>,
    %c71_i32 = arith.constant 71 : i32
    %52 = tpu.dynamic_rotate %20 by %c71_i32 dim 1 : vector<4x512xf32>, i32 -> vector<4x512xf32>
    %c1_i32_25 = arith.constant 1 : i32
    %53 = vector.broadcast %c1_i32_25 : i32 to vector<1x512xi32>
    %54 = arith.cmpi sge, %22, %53 : vector<1x512xi32>
    %c1_i32_26 = arith.constant 1 : i32
    %55 = vector.broadcast %c1_i32_26 : i32 to vector<1x512xi32>
    %56 = arith.cmpi sge, %23, %55 : vector<1x512xi32>
    %c6_i32 = arith.constant 6 : i32
    %57 = vector.broadcast %c6_i32 : i32 to vector<1x512xi32>
    %58 = arith.cmpi sle, %24, %57 : vector<1x512xi32>
    %59 = arith.andi %54, %56 : vector<1x512xi1>
    %60 = arith.andi %59, %58 : vector<1x512xi1>
    %cst_27 = arith.constant 0.000000e+00 : f32
    %61 = vector.shape_cast %60 : vector<1x512xi1> to vector<1x512xi1>
    %62 = vector.broadcast %61 : vector<1x512xi1> to vector<4x512xi1>
    %63 = vector.broadcast %cst_27 : f32 to vector<4x512xf32>
    %64 = arith.select %62, %52, %63 : vector<4x512xi1>, vector<4x512xf32>
    %c8 = arith.constant 8 : index
    %c0_28 = arith.constant 0 : index
    %65 = vector.load %arg10[%c8, %c0_28] : memref<128x512xf32, #tpu.memory_space<vmem>>, vector<4x512xf32>
    tpu.vector_store %arg10[%c8, %c0_28], %64 {strides = array<i32>} : memref<128x512xf32, #tpu.memory_space<vmem>>, vector<4x512xf32>,
    %c65_i32 = arith.constant 65 : i32
    %66 = tpu.dynamic_rotate %20 by %c65_i32 dim 1 : vector<4x512xf32>, i32 -> vector<4x512xf32>
    %c1_i32_29 = arith.constant 1 : i32
    %67 = vector.broadcast %c1_i32_29 : i32 to vector<1x512xi32>
    %68 = arith.cmpi sge, %22, %67 : vector<1x512xi32>
    %c1_i32_30 = arith.constant 1 : i32
    %69 = vector.broadcast %c1_i32_30 : i32 to vector<1x512xi32>
    %70 = arith.cmpi sge, %24, %69 : vector<1x512xi32>
    %71 = arith.andi %68, %70 : vector<1x512xi1>
    %cst_31 = arith.constant 0.000000e+00 : f32
    %72 = vector.shape_cast %71 : vector<1x512xi1> to vector<1x512xi1>
    %73 = vector.broadcast %72 : vector<1x512xi1> to vector<4x512xi1>
    %74 = vector.broadcast %cst_31 : f32 to vector<4x512xf32>
    %75 = arith.select %73, %66, %74 : vector<4x512xi1>, vector<4x512xf32>
    %c12 = arith.constant 12 : index
    %c0_32 = arith.constant 0 : index
    %76 = vector.load %arg10[%c12, %c0_32] : memref<128x512xf32, #tpu.memory_space<vmem>>, vector<4x512xf32>
    tpu.vector_store %arg10[%c12, %c0_32], %75 {strides = array<i32>} : memref<128x512xf32, #tpu.memory_space<vmem>>, vector<4x512xf32>,
    %c64_i32 = arith.constant 64 : i32
    %77 = tpu.dynamic_rotate %20 by %c64_i32 dim 1 : vector<4x512xf32>, i32 -> vector<4x512xf32>
    %c1_i32_33 = arith.constant 1 : i32
    %78 = vector.broadcast %c1_i32_33 : i32 to vector<1x512xi32>
    %79 = arith.cmpi sge, %22, %78 : vector<1x512xi32>
    %cst_34 = arith.constant 0.000000e+00 : f32
    %80 = vector.shape_cast %79 : vector<1x512xi1> to vector<1x512xi1>
    %81 = vector.broadcast %80 : vector<1x512xi1> to vector<4x512xi1>
    %82 = vector.broadcast %cst_34 : f32 to vector<4x512xf32>
    %83 = arith.select %81, %77, %82 : vector<4x512xi1>, vector<4x512xf32>
    %c16 = arith.constant 16 : index
    %c0_35 = arith.constant 0 : index
    %84 = vector.load %arg10[%c16, %c0_35] : memref<128x512xf32, #tpu.memory_space<vmem>>, vector<4x512xf32>
    tpu.vector_store %arg10[%c16, %c0_35], %83 {strides = array<i32>} : memref<128x512xf32, #tpu.memory_space<vmem>>, vector<4x512xf32>,
    %c63_i32 = arith.constant 63 : i32
    %85 = tpu.dynamic_rotate %20 by %c63_i32 dim 1 : vector<4x512xf32>, i32 -> vector<4x512xf32>
    %c1_i32_36 = arith.constant 1 : i32
    %86 = vector.broadcast %c1_i32_36 : i32 to vector<1x512xi32>
    %87 = arith.cmpi sge, %22, %86 : vector<1x512xi32>
    %c6_i32_37 = arith.constant 6 : i32
    %88 = vector.broadcast %c6_i32_37 : i32 to vector<1x512xi32>
    %89 = arith.cmpi sle, %24, %88 : vector<1x512xi32>
    %90 = arith.andi %87, %89 : vector<1x512xi1>
    %cst_38 = arith.constant 0.000000e+00 : f32
    %91 = vector.shape_cast %90 : vector<1x512xi1> to vector<1x512xi1>
    %92 = vector.broadcast %91 : vector<1x512xi1> to vector<4x512xi1>
    %93 = vector.broadcast %cst_38 : f32 to vector<4x512xf32>
    %94 = arith.select %92, %85, %93 : vector<4x512xi1>, vector<4x512xf32>
    %c20 = arith.constant 20 : index
    %c0_39 = arith.constant 0 : index
    %95 = vector.load %arg10[%c20, %c0_39] : memref<128x512xf32, #tpu.memory_space<vmem>>, vector<4x512xf32>
    tpu.vector_store %arg10[%c20, %c0_39], %94 {strides = array<i32>} : memref<128x512xf32, #tpu.memory_space<vmem>>, vector<4x512xf32>,
    %c57_i32 = arith.constant 57 : i32
    %96 = tpu.dynamic_rotate %20 by %c57_i32 dim 1 : vector<4x512xf32>, i32 -> vector<4x512xf32>
    %c1_i32_40 = arith.constant 1 : i32
    %97 = vector.broadcast %c1_i32_40 : i32 to vector<1x512xi32>
    %98 = arith.cmpi sge, %22, %97 : vector<1x512xi32>
    %c6_i32_41 = arith.constant 6 : i32
    %99 = vector.broadcast %c6_i32_41 : i32 to vector<1x512xi32>
    %100 = arith.cmpi sle, %23, %99 : vector<1x512xi32>
    %c1_i32_42 = arith.constant 1 : i32
    %101 = vector.broadcast %c1_i32_42 : i32 to vector<1x512xi32>
    %102 = arith.cmpi sge, %24, %101 : vector<1x512xi32>
    %103 = arith.andi %98, %100 : vector<1x512xi1>
    %104 = arith.andi %103, %102 : vector<1x512xi1>
    %cst_43 = arith.constant 0.000000e+00 : f32
    %105 = vector.shape_cast %104 : vector<1x512xi1> to vector<1x512xi1>
    %106 = vector.broadcast %105 : vector<1x512xi1> to vector<4x512xi1>
    %107 = vector.broadcast %cst_43 : f32 to vector<4x512xf32>
    %108 = arith.select %106, %96, %107 : vector<4x512xi1>, vector<4x512xf32>
    %c24 = arith.constant 24 : index
    %c0_44 = arith.constant 0 : index
    %109 = vector.load %arg10[%c24, %c0_44] : memref<128x512xf32, #tpu.memory_space<vmem>>, vector<4x512xf32>
    tpu.vector_store %arg10[%c24, %c0_44], %108 {strides = array<i32>} : memref<128x512xf32, #tpu.memory_space<vmem>>, vector<4x512xf32>,
    %c56_i32 = arith.constant 56 : i32
    %110 = tpu.dynamic_rotate %20 by %c56_i32 dim 1 : vector<4x512xf32>, i32 -> vector<4x512xf32>
    %c1_i32_45 = arith.constant 1 : i32
    %111 = vector.broadcast %c1_i32_45 : i32 to vector<1x512xi32>
    %112 = arith.cmpi sge, %22, %111 : vector<1x512xi32>
    %c6_i32_46 = arith.constant 6 : i32
    %113 = vector.broadcast %c6_i32_46 : i32 to vector<1x512xi32>
    %114 = arith.cmpi sle, %23, %113 : vector<1x512xi32>
    %115 = arith.andi %112, %114 : vector<1x512xi1>
    %cst_47 = arith.constant 0.000000e+00 : f32
    %116 = vector.shape_cast %115 : vector<1x512xi1> to vector<1x512xi1>
    %117 = vector.broadcast %116 : vector<1x512xi1> to vector<4x512xi1>
    %118 = vector.broadcast %cst_47 : f32 to vector<4x512xf32>
    %119 = arith.select %117, %110, %118 : vector<4x512xi1>, vector<4x512xf32>
    %c28 = arith.constant 28 : index
    %c0_48 = arith.constant 0 : index
    %120 = vector.load %arg10[%c28, %c0_48] : memref<128x512xf32, #tpu.memory_space<vmem>>, vector<4x512xf32>
    tpu.vector_store %arg10[%c28, %c0_48], %119 {strides = array<i32>} : memref<128x512xf32, #tpu.memory_space<vmem>>, vector<4x512xf32>,
    %c55_i32 = arith.constant 55 : i32
    %121 = tpu.dynamic_rotate %20 by %c55_i32 dim 1 : vector<4x512xf32>, i32 -> vector<4x512xf32>
    %c1_i32_49 = arith.constant 1 : i32
    %122 = vector.broadcast %c1_i32_49 : i32 to vector<1x512xi32>
    %123 = arith.cmpi sge, %22, %122 : vector<1x512xi32>
    %c6_i32_50 = arith.constant 6 : i32
    %124 = vector.broadcast %c6_i32_50 : i32 to vector<1x512xi32>
    %125 = arith.cmpi sle, %23, %124 : vector<1x512xi32>
    %c6_i32_51 = arith.constant 6 : i32
    %126 = vector.broadcast %c6_i32_51 : i32 to vector<1x512xi32>
    %127 = arith.cmpi sle, %24, %126 : vector<1x512xi32>
    %128 = arith.andi %123, %125 : vector<1x512xi1>
    %129 = arith.andi %128, %127 : vector<1x512xi1>
    %cst_52 = arith.constant 0.000000e+00 : f32
    %130 = vector.shape_cast %129 : vector<1x512xi1> to vector<1x512xi1>
    %131 = vector.broadcast %130 : vector<1x512xi1> to vector<4x512xi1>
    %132 = vector.broadcast %cst_52 : f32 to vector<4x512xf32>
    %133 = arith.select %131, %121, %132 : vector<4x512xi1>, vector<4x512xf32>
    %c32 = arith.constant 32 : index
    %c0_53 = arith.constant 0 : index
    %134 = vector.load %arg10[%c32, %c0_53] : memref<128x512xf32, #tpu.memory_space<vmem>>, vector<4x512xf32>
    tpu.vector_store %arg10[%c32, %c0_53], %133 {strides = array<i32>} : memref<128x512xf32, #tpu.memory_space<vmem>>, vector<4x512xf32>,
    %c9_i32 = arith.constant 9 : i32
    %135 = tpu.dynamic_rotate %20 by %c9_i32 dim 1 : vector<4x512xf32>, i32 -> vector<4x512xf32>
    %c1_i32_54 = arith.constant 1 : i32
    %136 = vector.broadcast %c1_i32_54 : i32 to vector<1x512xi32>
    %137 = arith.cmpi sge, %23, %136 : vector<1x512xi32>
    %c1_i32_55 = arith.constant 1 : i32
    %138 = vector.broadcast %c1_i32_55 : i32 to vector<1x512xi32>
    %139 = arith.cmpi sge, %24, %138 : vector<1x512xi32>
    %140 = arith.andi %137, %139 : vector<1x512xi1>
    %cst_56 = arith.constant 0.000000e+00 : f32
    %141 = vector.shape_cast %140 : vector<1x512xi1> to vector<1x512xi1>
    %142 = vector.broadcast %141 : vector<1x512xi1> to vector<4x512xi1>
    %143 = vector.broadcast %cst_56 : f32 to vector<4x512xf32>
    %144 = arith.select %142, %135, %143 : vector<4x512xi1>, vector<4x512xf32>
    %c36 = arith.constant 36 : index
    %c0_57 = arith.constant 0 : index
    %145 = vector.load %arg10[%c36, %c0_57] : memref<128x512xf32, #tpu.memory_space<vmem>>, vector<4x512xf32>
    tpu.vector_store %arg10[%c36, %c0_57], %144 {strides = array<i32>} : memref<128x512xf32, #tpu.memory_space<vmem>>, vector<4x512xf32>,
    %c8_i32 = arith.constant 8 : i32
    %146 = tpu.dynamic_rotate %20 by %c8_i32 dim 1 : vector<4x512xf32>, i32 -> vector<4x512xf32>
    %c1_i32_58 = arith.constant 1 : i32
    %147 = vector.broadcast %c1_i32_58 : i32 to vector<1x512xi32>
    %148 = arith.cmpi sge, %23, %147 : vector<1x512xi32>
    %cst_59 = arith.constant 0.000000e+00 : f32
    %149 = vector.shape_cast %148 : vector<1x512xi1> to vector<1x512xi1>
    %150 = vector.broadcast %149 : vector<1x512xi1> to vector<4x512xi1>
    %151 = vector.broadcast %cst_59 : f32 to vector<4x512xf32>
    %152 = arith.select %150, %146, %151 : vector<4x512xi1>, vector<4x512xf32>
    %c40 = arith.constant 40 : index
    %c0_60 = arith.constant 0 : index
    %153 = vector.load %arg10[%c40, %c0_60] : memref<128x512xf32, #tpu.memory_space<vmem>>, vector<4x512xf32>
    tpu.vector_store %arg10[%c40, %c0_60], %152 {strides = array<i32>} : memref<128x512xf32, #tpu.memory_space<vmem>>, vector<4x512xf32>,
    %c7_i32 = arith.constant 7 : i32
    %154 = tpu.dynamic_rotate %20 by %c7_i32 dim 1 : vector<4x512xf32>, i32 -> vector<4x512xf32>
    %c1_i32_61 = arith.constant 1 : i32
    %155 = vector.broadcast %c1_i32_61 : i32 to vector<1x512xi32>
    %156 = arith.cmpi sge, %23, %155 : vector<1x512xi32>
    %c6_i32_62 = arith.constant 6 : i32
    %157 = vector.broadcast %c6_i32_62 : i32 to vector<1x512xi32>
    %158 = arith.cmpi sle, %24, %157 : vector<1x512xi32>
    %159 = arith.andi %156, %158 : vector<1x512xi1>
    %cst_63 = arith.constant 0.000000e+00 : f32
    %160 = vector.shape_cast %159 : vector<1x512xi1> to vector<1x512xi1>
    %161 = vector.broadcast %160 : vector<1x512xi1> to vector<4x512xi1>
    %162 = vector.broadcast %cst_63 : f32 to vector<4x512xf32>
    %163 = arith.select %161, %154, %162 : vector<4x512xi1>, vector<4x512xf32>
    %c44 = arith.constant 44 : index
    %c0_64 = arith.constant 0 : index
    %164 = vector.load %arg10[%c44, %c0_64] : memref<128x512xf32, #tpu.memory_space<vmem>>, vector<4x512xf32>
    tpu.vector_store %arg10[%c44, %c0_64], %163 {strides = array<i32>} : memref<128x512xf32, #tpu.memory_space<vmem>>, vector<4x512xf32>,
    %c1_i32_65 = arith.constant 1 : i32
    %165 = tpu.dynamic_rotate %20 by %c1_i32_65 dim 1 : vector<4x512xf32>, i32 -> vector<4x512xf32>
    %c1_i32_66 = arith.constant 1 : i32
    %166 = vector.broadcast %c1_i32_66 : i32 to vector<1x512xi32>
    %167 = arith.cmpi sge, %24, %166 : vector<1x512xi32>
    %cst_67 = arith.constant 0.000000e+00 : f32
    %168 = vector.shape_cast %167 : vector<1x512xi1> to vector<1x512xi1>
    %169 = vector.broadcast %168 : vector<1x512xi1> to vector<4x512xi1>
    %170 = vector.broadcast %cst_67 : f32 to vector<4x512xf32>
    %171 = arith.select %169, %165, %170 : vector<4x512xi1>, vector<4x512xf32>
    %c48 = arith.constant 48 : index
    %c0_68 = arith.constant 0 : index
    %172 = vector.load %arg10[%c48, %c0_68] : memref<128x512xf32, #tpu.memory_space<vmem>>, vector<4x512xf32>
    tpu.vector_store %arg10[%c48, %c0_68], %171 {strides = array<i32>} : memref<128x512xf32, #tpu.memory_space<vmem>>, vector<4x512xf32>,
    %c52 = arith.constant 52 : index
    %c0_69 = arith.constant 0 : index
    %173 = vector.load %arg10[%c52, %c0_69] : memref<128x512xf32, #tpu.memory_space<vmem>>, vector<4x512xf32>
    tpu.vector_store %arg10[%c52, %c0_69], %20 {strides = array<i32>} : memref<128x512xf32, #tpu.memory_space<vmem>>, vector<4x512xf32>,
    %c511_i32 = arith.constant 511 : i32
    %174 = tpu.dynamic_rotate %20 by %c511_i32 dim 1 : vector<4x512xf32>, i32 -> vector<4x512xf32>
    %c6_i32_70 = arith.constant 6 : i32
    %175 = vector.broadcast %c6_i32_70 : i32 to vector<1x512xi32>
    %176 = arith.cmpi sle, %24, %175 : vector<1x512xi32>
    %cst_71 = arith.constant 0.000000e+00 : f32
    %177 = vector.shape_cast %176 : vector<1x512xi1> to vector<1x512xi1>
    %178 = vector.broadcast %177 : vector<1x512xi1> to vector<4x512xi1>
    %179 = vector.broadcast %cst_71 : f32 to vector<4x512xf32>
    %180 = arith.select %178, %174, %179 : vector<4x512xi1>, vector<4x512xf32>
    %c56 = arith.constant 56 : index
    %c0_72 = arith.constant 0 : index
    %181 = vector.load %arg10[%c56, %c0_72] : memref<128x512xf32, #tpu.memory_space<vmem>>, vector<4x512xf32>
    tpu.vector_store %arg10[%c56, %c0_72], %180 {strides = array<i32>} : memref<128x512xf32, #tpu.memory_space<vmem>>, vector<4x512xf32>,
    %c505_i32 = arith.constant 505 : i32
    %182 = tpu.dynamic_rotate %20 by %c505_i32 dim 1 : vector<4x512xf32>, i32 -> vector<4x512xf32>
    %c6_i32_73 = arith.constant 6 : i32
    %183 = vector.broadcast %c6_i32_73 : i32 to vector<1x512xi32>
    %184 = arith.cmpi sle, %23, %183 : vector<1x512xi32>
    %c1_i32_74 = arith.constant 1 : i32
    %185 = vector.broadcast %c1_i32_74 : i32 to vector<1x512xi32>
    %186 = arith.cmpi sge, %24, %185 : vector<1x512xi32>
    %187 = arith.andi %184, %186 : vector<1x512xi1>
    %cst_75 = arith.constant 0.000000e+00 : f32
    %188 = vector.shape_cast %187 : vector<1x512xi1> to vector<1x512xi1>
    %189 = vector.broadcast %188 : vector<1x512xi1> to vector<4x512xi1>
    %190 = vector.broadcast %cst_75 : f32 to vector<4x512xf32>
    %191 = arith.select %189, %182, %190 : vector<4x512xi1>, vector<4x512xf32>
    %c60 = arith.constant 60 : index
    %c0_76 = arith.constant 0 : index
    %192 = vector.load %arg10[%c60, %c0_76] : memref<128x512xf32, #tpu.memory_space<vmem>>, vector<4x512xf32>
    tpu.vector_store %arg10[%c60, %c0_76], %191 {strides = array<i32>} : memref<128x512xf32, #tpu.memory_space<vmem>>, vector<4x512xf32>,
    %c504_i32 = arith.constant 504 : i32
    %193 = tpu.dynamic_rotate %20 by %c504_i32 dim 1 : vector<4x512xf32>, i32 -> vector<4x512xf32>
    %c6_i32_77 = arith.constant 6 : i32
    %194 = vector.broadcast %c6_i32_77 : i32 to vector<1x512xi32>
    %195 = arith.cmpi sle, %23, %194 : vector<1x512xi32>
    %cst_78 = arith.constant 0.000000e+00 : f32
    %196 = vector.shape_cast %195 : vector<1x512xi1> to vector<1x512xi1>
    %197 = vector.broadcast %196 : vector<1x512xi1> to vector<4x512xi1>
    %198 = vector.broadcast %cst_78 : f32 to vector<4x512xf32>
    %199 = arith.select %197, %193, %198 : vector<4x512xi1>, vector<4x512xf32>
    %c64 = arith.constant 64 : index
    %c0_79 = arith.constant 0 : index
    %200 = vector.load %arg10[%c64, %c0_79] : memref<128x512xf32, #tpu.memory_space<vmem>>, vector<4x512xf32>
    tpu.vector_store %arg10[%c64, %c0_79], %199 {strides = array<i32>} : memref<128x512xf32, #tpu.memory_space<vmem>>, vector<4x512xf32>,
    %c503_i32 = arith.constant 503 : i32
    %201 = tpu.dynamic_rotate %20 by %c503_i32 dim 1 : vector<4x512xf32>, i32 -> vector<4x512xf32>
    %c6_i32_80 = arith.constant 6 : i32
    %202 = vector.broadcast %c6_i32_80 : i32 to vector<1x512xi32>
    %203 = arith.cmpi sle, %23, %202 : vector<1x512xi32>
    %c6_i32_81 = arith.constant 6 : i32
    %204 = vector.broadcast %c6_i32_81 : i32 to vector<1x512xi32>
    %205 = arith.cmpi sle, %24, %204 : vector<1x512xi32>
    %206 = arith.andi %203, %205 : vector<1x512xi1>
    %cst_82 = arith.constant 0.000000e+00 : f32
    %207 = vector.shape_cast %206 : vector<1x512xi1> to vector<1x512xi1>
    %208 = vector.broadcast %207 : vector<1x512xi1> to vector<4x512xi1>
    %209 = vector.broadcast %cst_82 : f32 to vector<4x512xf32>
    %210 = arith.select %208, %201, %209 : vector<4x512xi1>, vector<4x512xf32>
    %c68 = arith.constant 68 : index
    %c0_83 = arith.constant 0 : index
    %211 = vector.load %arg10[%c68, %c0_83] : memref<128x512xf32, #tpu.memory_space<vmem>>, vector<4x512xf32>
    tpu.vector_store %arg10[%c68, %c0_83], %210 {strides = array<i32>} : memref<128x512xf32, #tpu.memory_space<vmem>>, vector<4x512xf32>,
    %c457_i32 = arith.constant 457 : i32
    %212 = tpu.dynamic_rotate %20 by %c457_i32 dim 1 : vector<4x512xf32>, i32 -> vector<4x512xf32>
    %c6_i32_84 = arith.constant 6 : i32
    %213 = vector.broadcast %c6_i32_84 : i32 to vector<1x512xi32>
    %214 = arith.cmpi sle, %22, %213 : vector<1x512xi32>
    %c1_i32_85 = arith.constant 1 : i32
    %215 = vector.broadcast %c1_i32_85 : i32 to vector<1x512xi32>
    %216 = arith.cmpi sge, %23, %215 : vector<1x512xi32>
    %c1_i32_86 = arith.constant 1 : i32
    %217 = vector.broadcast %c1_i32_86 : i32 to vector<1x512xi32>
    %218 = arith.cmpi sge, %24, %217 : vector<1x512xi32>
    %219 = arith.andi %214, %216 : vector<1x512xi1>
    %220 = arith.andi %219, %218 : vector<1x512xi1>
    %cst_87 = arith.constant 0.000000e+00 : f32
    %221 = vector.shape_cast %220 : vector<1x512xi1> to vector<1x512xi1>
    %222 = vector.broadcast %221 : vector<1x512xi1> to vector<4x512xi1>
    %223 = vector.broadcast %cst_87 : f32 to vector<4x512xf32>
    %224 = arith.select %222, %212, %223 : vector<4x512xi1>, vector<4x512xf32>
    %c72 = arith.constant 72 : index
    %c0_88 = arith.constant 0 : index
    %225 = vector.load %arg10[%c72, %c0_88] : memref<128x512xf32, #tpu.memory_space<vmem>>, vector<4x512xf32>
    tpu.vector_store %arg10[%c72, %c0_88], %224 {strides = array<i32>} : memref<128x512xf32, #tpu.memory_space<vmem>>, vector<4x512xf32>,
    %c456_i32 = arith.constant 456 : i32
    %226 = tpu.dynamic_rotate %20 by %c456_i32 dim 1 : vector<4x512xf32>, i32 -> vector<4x512xf32>
    %c6_i32_89 = arith.constant 6 : i32
    %227 = vector.broadcast %c6_i32_89 : i32 to vector<1x512xi32>
    %228 = arith.cmpi sle, %22, %227 : vector<1x512xi32>
    %c1_i32_90 = arith.constant 1 : i32
    %229 = vector.broadcast %c1_i32_90 : i32 to vector<1x512xi32>
    %230 = arith.cmpi sge, %23, %229 : vector<1x512xi32>
    %231 = arith.andi %228, %230 : vector<1x512xi1>
    %cst_91 = arith.constant 0.000000e+00 : f32
    %232 = vector.shape_cast %231 : vector<1x512xi1> to vector<1x512xi1>
    %233 = vector.broadcast %232 : vector<1x512xi1> to vector<4x512xi1>
    %234 = vector.broadcast %cst_91 : f32 to vector<4x512xf32>
    %235 = arith.select %233, %226, %234 : vector<4x512xi1>, vector<4x512xf32>
    %c76 = arith.constant 76 : index
    %c0_92 = arith.constant 0 : index
    %236 = vector.load %arg10[%c76, %c0_92] : memref<128x512xf32, #tpu.memory_space<vmem>>, vector<4x512xf32>
    tpu.vector_store %arg10[%c76, %c0_92], %235 {strides = array<i32>} : memref<128x512xf32, #tpu.memory_space<vmem>>, vector<4x512xf32>,
    %c455_i32 = arith.constant 455 : i32
    %237 = tpu.dynamic_rotate %20 by %c455_i32 dim 1 : vector<4x512xf32>, i32 -> vector<4x512xf32>
    %c6_i32_93 = arith.constant 6 : i32
    %238 = vector.broadcast %c6_i32_93 : i32 to vector<1x512xi32>
    %239 = arith.cmpi sle, %22, %238 : vector<1x512xi32>
    %c1_i32_94 = arith.constant 1 : i32
    %240 = vector.broadcast %c1_i32_94 : i32 to vector<1x512xi32>
    %241 = arith.cmpi sge, %23, %240 : vector<1x512xi32>
    %c6_i32_95 = arith.constant 6 : i32
    %242 = vector.broadcast %c6_i32_95 : i32 to vector<1x512xi32>
    %243 = arith.cmpi sle, %24, %242 : vector<1x512xi32>
    %244 = arith.andi %239, %241 : vector<1x512xi1>
    %245 = arith.andi %244, %243 : vector<1x512xi1>
    %cst_96 = arith.constant 0.000000e+00 : f32
    %246 = vector.shape_cast %245 : vector<1x512xi1> to vector<1x512xi1>
    %247 = vector.broadcast %246 : vector<1x512xi1> to vector<4x512xi1>
    %248 = vector.broadcast %cst_96 : f32 to vector<4x512xf32>
    %249 = arith.select %247, %237, %248 : vector<4x512xi1>, vector<4x512xf32>
    %c80 = arith.constant 80 : index
    %c0_97 = arith.constant 0 : index
    %250 = vector.load %arg10[%c80, %c0_97] : memref<128x512xf32, #tpu.memory_space<vmem>>, vector<4x512xf32>
    tpu.vector_store %arg10[%c80, %c0_97], %249 {strides = array<i32>} : memref<128x512xf32, #tpu.memory_space<vmem>>, vector<4x512xf32>,
    %c449_i32 = arith.constant 449 : i32
    %251 = tpu.dynamic_rotate %20 by %c449_i32 dim 1 : vector<4x512xf32>, i32 -> vector<4x512xf32>
    %c6_i32_98 = arith.constant 6 : i32
    %252 = vector.broadcast %c6_i32_98 : i32 to vector<1x512xi32>
    %253 = arith.cmpi sle, %22, %252 : vector<1x512xi32>
    %c1_i32_99 = arith.constant 1 : i32
    %254 = vector.broadcast %c1_i32_99 : i32 to vector<1x512xi32>
    %255 = arith.cmpi sge, %24, %254 : vector<1x512xi32>
    %256 = arith.andi %253, %255 : vector<1x512xi1>
    %cst_100 = arith.constant 0.000000e+00 : f32
    %257 = vector.shape_cast %256 : vector<1x512xi1> to vector<1x512xi1>
    %258 = vector.broadcast %257 : vector<1x512xi1> to vector<4x512xi1>
    %259 = vector.broadcast %cst_100 : f32 to vector<4x512xf32>
    %260 = arith.select %258, %251, %259 : vector<4x512xi1>, vector<4x512xf32>
    %c84 = arith.constant 84 : index
    %c0_101 = arith.constant 0 : index
    %261 = vector.load %arg10[%c84, %c0_101] : memref<128x512xf32, #tpu.memory_space<vmem>>, vector<4x512xf32>
    tpu.vector_store %arg10[%c84, %c0_101], %260 {strides = array<i32>} : memref<128x512xf32, #tpu.memory_space<vmem>>, vector<4x512xf32>,
    %c448_i32 = arith.constant 448 : i32
    %262 = tpu.dynamic_rotate %20 by %c448_i32 dim 1 : vector<4x512xf32>, i32 -> vector<4x512xf32>
    %c6_i32_102 = arith.constant 6 : i32
    %263 = vector.broadcast %c6_i32_102 : i32 to vector<1x512xi32>
    %264 = arith.cmpi sle, %22, %263 : vector<1x512xi32>
    %cst_103 = arith.constant 0.000000e+00 : f32
    %265 = vector.shape_cast %264 : vector<1x512xi1> to vector<1x512xi1>
    %266 = vector.broadcast %265 : vector<1x512xi1> to vector<4x512xi1>
    %267 = vector.broadcast %cst_103 : f32 to vector<4x512xf32>
    %268 = arith.select %266, %262, %267 : vector<4x512xi1>, vector<4x512xf32>
    %c88 = arith.constant 88 : index
    %c0_104 = arith.constant 0 : index
    %269 = vector.load %arg10[%c88, %c0_104] : memref<128x512xf32, #tpu.memory_space<vmem>>, vector<4x512xf32>
    tpu.vector_store %arg10[%c88, %c0_104], %268 {strides = array<i32>} : memref<128x512xf32, #tpu.memory_space<vmem>>, vector<4x512xf32>,
    %c447_i32 = arith.constant 447 : i32
    %270 = tpu.dynamic_rotate %20 by %c447_i32 dim 1 : vector<4x512xf32>, i32 -> vector<4x512xf32>
    %c6_i32_105 = arith.constant 6 : i32
    %271 = vector.broadcast %c6_i32_105 : i32 to vector<1x512xi32>
    %272 = arith.cmpi sle, %22, %271 : vector<1x512xi32>
    %c6_i32_106 = arith.constant 6 : i32
    %273 = vector.broadcast %c6_i32_106 : i32 to vector<1x512xi32>
    %274 = arith.cmpi sle, %24, %273 : vector<1x512xi32>
    %275 = arith.andi %272, %274 : vector<1x512xi1>
    %cst_107 = arith.constant 0.000000e+00 : f32
    %276 = vector.shape_cast %275 : vector<1x512xi1> to vector<1x512xi1>
    %277 = vector.broadcast %276 : vector<1x512xi1> to vector<4x512xi1>
    %278 = vector.broadcast %cst_107 : f32 to vector<4x512xf32>
    %279 = arith.select %277, %270, %278 : vector<4x512xi1>, vector<4x512xf32>
    %c92 = arith.constant 92 : index
    %c0_108 = arith.constant 0 : index
    %280 = vector.load %arg10[%c92, %c0_108] : memref<128x512xf32, #tpu.memory_space<vmem>>, vector<4x512xf32>
    tpu.vector_store %arg10[%c92, %c0_108], %279 {strides = array<i32>} : memref<128x512xf32, #tpu.memory_space<vmem>>, vector<4x512xf32>,
    %c441_i32 = arith.constant 441 : i32
    %281 = tpu.dynamic_rotate %20 by %c441_i32 dim 1 : vector<4x512xf32>, i32 -> vector<4x512xf32>
    %c6_i32_109 = arith.constant 6 : i32
    %282 = vector.broadcast %c6_i32_109 : i32 to vector<1x512xi32>
    %283 = arith.cmpi sle, %22, %282 : vector<1x512xi32>
    %c6_i32_110 = arith.constant 6 : i32
    %284 = vector.broadcast %c6_i32_110 : i32 to vector<1x512xi32>
    %285 = arith.cmpi sle, %23, %284 : vector<1x512xi32>
    %c1_i32_111 = arith.constant 1 : i32
    %286 = vector.broadcast %c1_i32_111 : i32 to vector<1x512xi32>
    %287 = arith.cmpi sge, %24, %286 : vector<1x512xi32>
    %288 = arith.andi %283, %285 : vector<1x512xi1>
    %289 = arith.andi %288, %287 : vector<1x512xi1>
    %cst_112 = arith.constant 0.000000e+00 : f32
    %290 = vector.shape_cast %289 : vector<1x512xi1> to vector<1x512xi1>
    %291 = vector.broadcast %290 : vector<1x512xi1> to vector<4x512xi1>
    %292 = vector.broadcast %cst_112 : f32 to vector<4x512xf32>
    %293 = arith.select %291, %281, %292 : vector<4x512xi1>, vector<4x512xf32>
    %c96 = arith.constant 96 : index
    %c0_113 = arith.constant 0 : index
    %294 = vector.load %arg10[%c96, %c0_113] : memref<128x512xf32, #tpu.memory_space<vmem>>, vector<4x512xf32>
    tpu.vector_store %arg10[%c96, %c0_113], %293 {strides = array<i32>} : memref<128x512xf32, #tpu.memory_space<vmem>>, vector<4x512xf32>,
    %c440_i32 = arith.constant 440 : i32
    %295 = tpu.dynamic_rotate %20 by %c440_i32 dim 1 : vector<4x512xf32>, i32 -> vector<4x512xf32>
    %c6_i32_114 = arith.constant 6 : i32
    %296 = vector.broadcast %c6_i32_114 : i32 to vector<1x512xi32>
    %297 = arith.cmpi sle, %22, %296 : vector<1x512xi32>
    %c6_i32_115 = arith.constant 6 : i32
    %298 = vector.broadcast %c6_i32_115 : i32 to vector<1x512xi32>
    %299 = arith.cmpi sle, %23, %298 : vector<1x512xi32>
    %300 = arith.andi %297, %299 : vector<1x512xi1>
    %cst_116 = arith.constant 0.000000e+00 : f32
    %301 = vector.shape_cast %300 : vector<1x512xi1> to vector<1x512xi1>
    %302 = vector.broadcast %301 : vector<1x512xi1> to vector<4x512xi1>
    %303 = vector.broadcast %cst_116 : f32 to vector<4x512xf32>
    %304 = arith.select %302, %295, %303 : vector<4x512xi1>, vector<4x512xf32>
    %c100 = arith.constant 100 : index
    %c0_117 = arith.constant 0 : index
    %305 = vector.load %arg10[%c100, %c0_117] : memref<128x512xf32, #tpu.memory_space<vmem>>, vector<4x512xf32>
    tpu.vector_store %arg10[%c100, %c0_117], %304 {strides = array<i32>} : memref<128x512xf32, #tpu.memory_space<vmem>>, vector<4x512xf32>,
    %c439_i32 = arith.constant 439 : i32
    %306 = tpu.dynamic_rotate %20 by %c439_i32 dim 1 : vector<4x512xf32>, i32 -> vector<4x512xf32>
    %c6_i32_118 = arith.constant 6 : i32
    %307 = vector.broadcast %c6_i32_118 : i32 to vector<1x512xi32>
    %308 = arith.cmpi sle, %22, %307 : vector<1x512xi32>
    %c6_i32_119 = arith.constant 6 : i32
    %309 = vector.broadcast %c6_i32_119 : i32 to vector<1x512xi32>
    %310 = arith.cmpi sle, %23, %309 : vector<1x512xi32>
    %c6_i32_120 = arith.constant 6 : i32
    %311 = vector.broadcast %c6_i32_120 : i32 to vector<1x512xi32>
    %312 = arith.cmpi sle, %24, %311 : vector<1x512xi32>
    %313 = arith.andi %308, %310 : vector<1x512xi1>
    %314 = arith.andi %313, %312 : vector<1x512xi1>
    %cst_121 = arith.constant 0.000000e+00 : f32
    %315 = vector.shape_cast %314 : vector<1x512xi1> to vector<1x512xi1>
    %316 = vector.broadcast %315 : vector<1x512xi1> to vector<4x512xi1>
    %317 = vector.broadcast %cst_121 : f32 to vector<4x512xf32>
    %318 = arith.select %316, %306, %317 : vector<4x512xi1>, vector<4x512xf32>
    %c104 = arith.constant 104 : index
    %c0_122 = arith.constant 0 : index
    %319 = vector.load %arg10[%c104, %c0_122] : memref<128x512xf32, #tpu.memory_space<vmem>>, vector<4x512xf32>
    tpu.vector_store %arg10[%c104, %c0_122], %318 {strides = array<i32>} : memref<128x512xf32, #tpu.memory_space<vmem>>, vector<4x512xf32>,
    %c0_123 = arith.constant 0 : index
    %c0_124 = arith.constant 0 : index
    %320 = vector.load %arg6[%c0_123, %c0_124] : memref<8x128xf32, #tpu.memory_space<vmem>>, vector<8x128xf32>
    %c0_125 = arith.constant 0 : index
    %c0_126 = arith.constant 0 : index
    %321 = vector.load %arg10[%c0_125, %c0_126] : memref<128x512xf32, #tpu.memory_space<vmem>>, vector<128x512xf32>
    %cst_127 = arith.constant dense<0.000000e+00> : vector<8x512xf32>
    %322 = tpu.matmul %320, %321, %cst_127 {dimension_numbers = #tpu.dot_dimension_numbers<[1], [0], [0], [1], [0, 0, 1, 1], [], []>} : vector<8x128xf32>, vector<128x512xf32>, vector<8x512xf32> -> vector<8x512xf32>
    %c0_128 = arith.constant 0 : index
    %c0_129 = arith.constant 0 : index
    %323 = vector.load %arg7[%c0_128, %c0_129] : memref<8x1xf32, #tpu.memory_space<vmem>>, vector<8x1xf32>
    %324 = vector.broadcast %323 : vector<8x1xf32> to vector<8x512xf32>
    %325 = arith.addf %322, %324 : vector<8x512xf32>
    %326 = vector.shape_cast %325 : vector<8x512xf32> to vector<1x8x512xf32>
    %c0_130 = arith.constant 0 : index
    %c0_131 = arith.constant 0 : index
    %c0_132 = arith.constant 0 : index
    %327 = vector.load %arg9[%c0_130, %c0_131, %c0_132] : memref<1x8x512xf32, #tpu.memory_space<vmem>>, vector<1x8x512xf32>
    tpu.vector_store %arg9[%c0_130, %c0_131, %c0_132], %326 {strides = array<i32>} : memref<1x8x512xf32, #tpu.memory_space<vmem>>, vector<1x8x512xf32>,
    return
  }
  func.func @transform_0(%arg0: i32) -> (i32, i32, i32) {
    %c0_i32 = arith.constant 0 : i32
    %c0_i32_0 = arith.constant 0 : i32
    %c0_i32_1 = arith.constant 0 : i32
    return %arg0, %c0_i32, %c0_i32_0 : i32, i32, i32
  }
  func.func @transform_1(%arg0: i32) -> (i32, i32) {
    %c0_i32 = arith.constant 0 : i32
    %c0_i32_0 = arith.constant 0 : i32
    %c0_i32_1 = arith.constant 0 : i32
    return %c0_i32, %c0_i32_0 : i32, i32
  }
  func.func @transform_2(%arg0: i32) -> (i32, i32) {
    %c0_i32 = arith.constant 0 : i32
    %c0_i32_0 = arith.constant 0 : i32
    %c0_i32_1 = arith.constant 0 : i32
    return %c0_i32, %c0_i32_0 : i32, i32
  }
  func.func @transform_3(%arg0: i32) -> (i32, i32) {
    %c0_i32 = arith.constant 0 : i32
    %c0_i32_0 = arith.constant 0 : i32
    %c0_i32_1 = arith.constant 0 : i32
    return %c0_i32, %c0_i32_0 : i32, i32
  }
  func.func @transform_4(%arg0: i32) -> (i32, i32) {
    %c0_i32 = arith.constant 0 : i32
    %c0_i32_0 = arith.constant 0 : i32
    %c0_i32_1 = arith.constant 0 : i32
    return %c0_i32, %c0_i32_0 : i32, i32
  }
  func.func @transform_5(%arg0: i32) -> (i32, i32) {
    %c0_i32 = arith.constant 0 : i32
    %c0_i32_0 = arith.constant 0 : i32
    %c0_i32_1 = arith.constant 0 : i32
    return %c0_i32, %c0_i32_0 : i32, i32
  }
  func.func @transform_6(%arg0: i32) -> (i32, i32) {
    %c0_i32 = arith.constant 0 : i32
    %c0_i32_0 = arith.constant 0 : i32
    %c0_i32_1 = arith.constant 0 : i32
    return %c0_i32, %c0_i32_0 : i32, i32
  }
  func.func @transform_7(%arg0: i32) -> (i32, i32) {
    %c0_i32 = arith.constant 0 : i32
    %c0_i32_0 = arith.constant 0 : i32
    %c0_i32_1 = arith.constant 0 : i32
    return %c0_i32, %c0_i32_0 : i32, i32
  }
  func.func @transform_8(%arg0: i32) -> (i32, i32, i32) {
    %c0_i32 = arith.constant 0 : i32
    %c0_i32_0 = arith.constant 0 : i32
    %c0_i32_1 = arith.constant 0 : i32
    return %arg0, %c0_i32, %c0_i32_0 : i32, i32, i32
  }
}

</mosaic_0001>

<llo_original>
// kernel: tpu_custom_call.1
$region0: #{tpu_custom_call.1}
  #allocation0 [shape = 'u32[]', space=smem, size = 0x4, offset = 0x4, fixed_abs, tag = 'smem constant byte address 0x4 - core index']
  #allocation1 [shape = 'u32[72,128]{1,0:T(1,128)}', space=vmem, size = 0x9000, scoped, tag = 'internal scratch']
  #allocation2 [shape = 'f32[128,512]{1,0:T(8,128)}', space=vmem, size = 0x40000, scoped, tag = 'scratch operand']
  %s0 = inlined_call_operand.hbm [shape: f32[2,4,512], index: 0, kind: input, shape index: {}]
  %s1 = inlined_call_operand.vmem [shape: f32[4,1], index: 1, kind: input, shape index: {}]
  %s2 = inlined_call_operand.vmem [shape: f32[4,1], index: 2, kind: input, shape index: {}]
  %s3 = inlined_call_operand.vmem [shape: f32[4,4], index: 3, kind: input, shape index: {}]
  %s4 = inlined_call_operand.vmem [shape: f32[4,1], index: 4, kind: input, shape index: {}]
  %s5 = inlined_call_operand.vmem [shape: f32[8,128], index: 5, kind: input, shape index: {}]
  %s6 = inlined_call_operand.vmem [shape: f32[8,1], index: 6, kind: input, shape index: {}]
  %s7 = inlined_call_operand.hbm [shape: s32[3,512], index: 7, kind: input, shape index: {}]
  %s8 = inlined_call_operand.hbm [shape: f32[2,8,512], index: 8, kind: output, shape index: {}]
  %s9 = sld [smem:[#allocation0]]
  $region73: #{tpu_custom_call.1} parent=0
    _
  %s11 = ssub.s32 1, %s9
  %s12 = scalar_select 0, %s11, %s9
  $region1: #{tpu_custom_call.1} parent=0
    #allocation3 [shape = 'u8[16384]{0}', space=vmem, size = 0x4000, scoped, tag = 'input window, operand 0']
    #allocation4 [shape = 's32[2]{0}', space=sflag, size = 0x8, scoped, tag = 'scoped memory for tpu_custom_call.1']
    #allocation5 [shape = 's32[2]{0}', space=sflag, size = 0x8, scoped, tag = 'scoped memory for tpu_custom_call.1']
    #allocation6 [shape = 'u8[8192]{0}', space=vmem, size = 0x2000, scoped, tag = 'input window, operand 7, single buffered']
    #allocation7 [shape = 's32[1]{0}', space=sflag, size = 0x4, scoped, tag = 'scoped memory for tpu_custom_call.1']
    #allocation8 [shape = 'u8[32768]{0}', space=vmem, size = 0x8000, scoped, tag = 'output window, operand 0']
    %13 = vsyncpa [#allocation4], 0
    %s14 = scalar_lea.sflag [#allocation4], 1
    %15 = vsyncpa %s14, 0
    %16 = vsyncpa [#allocation7], 0
    %17 = vsyncpa [#allocation5], 0
    %s18 = scalar_lea.sflag [#allocation5], 1
    %19 = vsyncpa %s18, 0
    loop: start=0, step=1, limit=4
    $region2: #{tpu_custom_call.1} parent=1 // loop_pre_header
      _
    $region3: #{tpu_custom_call.1} parent=1 // loop_header
      %s21 = sphi 0, %s25
      %p22 = scmp.ge.s32.totalorder %s21, 4
      %s31 = sphi 0, %s33
      %s34 = sphi 0, %s31
      %s35 = sphi 0, %s34
      %s51 = sphi 0, %s35
      %s55 = sphi 0, %s55
      %s57 = sphi 0, %s55
      %s58 = sphi 0, %s57
      %s72 = sphi 0, %s58
      %s76 = sphi 0, %s76
      %s78 = sphi 0, %s76
      %s79 = sphi 0, %s78
      %s93 = sphi 0, %s79
      %s97 = sphi 0, %s97
      %s99 = sphi 0, %s97
      %s100 = sphi 0, %s99
      %s114 = sphi 0, %s100
      %s118 = sphi 0, %s118
      %s120 = sphi 0, %s118
      %s121 = sphi 0, %s120
      %s135 = sphi 0, %s121
      %s139 = sphi 0, %s139
      %s141 = sphi 0, %s139
      %s142 = sphi 0, %s141
      %s156 = sphi 0, %s142
      %s160 = sphi 0, %s160
      %s162 = sphi 0, %s160
      %s163 = sphi 0, %s162
      %s177 = sphi 0, %s163
      %s181 = sphi 0, %s181
      %s183 = sphi 0, %s181
      %s184 = sphi 0, %s183
      %s198 = sphi 0, %s184
      %s204 = sphi 0, %s206
      %s207 = sphi 0, %s204
      %s208 = sphi 0, %s207
      %s224 = sphi 0, %s208
    $region4: #{tpu_custom_call.1} parent=1 // loop_header_branch
      %24 = sbr.rel (%p22) target = $region8
    $region5: #{tpu_custom_call.1} parent=1 // loop_body
      %s26 = ssub.s32 %s21, 1
      %s27 = ssub.s32 %s21, 2
      %s28 = sadd.s32 %s21, 1
      %s29 = ssub.s32 %s21, %s28
      %p30 = scmp.eq.s32.totalorder %s29, 0
      %s32 = sadd.s32 %s31, 1
      %s33 = scalar_select %p30, %s31, %s32
      %p36 = pneg %p30
      %p37 = scmp.eq.s32.totalorder %s21, 1
      %p38 = por %p36, %p37
      %p39 = scmp.ne.s32.totalorder %s31, %s34
      %p40 = scmp.eq.s32.totalorder %s21, 0
      %p41 = por %p39, %p40
      %p42 = scmp.ne.s32.totalorder %s31, %s34
      %p43 = scmp.eq.s32.totalorder %s26, 1
      %p44 = por %p42, %p43
      %p45 = scmp.ne.s32.totalorder %s34, %s35
      %p46 = scmp.eq.s32.totalorder %s26, 0
      %p47 = por %p45, %p46
      %p48 = scmp.ne.s32.totalorder %s34, %s35
      %p49 = scmp.eq.s32.totalorder %s27, 1
      %p50 = por %p48, %p49
      %p52 = scmp.ne.s32.totalorder %s35, %s51
      %p53 = scmp.eq.s32.totalorder %s27, 0
      %p54 = por %p52, %p53
      %s56 = sadd.s32 %s55, 1
      %p59 = scmp.eq.s32.totalorder %s21, 1
      %p60 = scmp.ne.s32.totalorder %s55, %s57
      %p61 = scmp.eq.s32.totalorder %s21, 0
      %p62 = por %p60, %p61
      %p63 = scmp.ne.s32.totalorder %s55, %s57
      %p64 = scmp.eq.s32.totalorder %s26, 1
      %p65 = por %p63, %p64
      %p66 = scmp.ne.s32.totalorder %s57, %s58
      %p67 = scmp.eq.s32.totalorder %s26, 0
      %p68 = por %p66, %p67
      %p69 = scmp.ne.s32.totalorder %s57, %s58
      %p70 = scmp.eq.s32.totalorder %s27, 1
      %p71 = por %p69, %p70
      %p73 = scmp.ne.s32.totalorder %s58, %s72
      %p74 = scmp.eq.s32.totalorder %s27, 0
      %p75 = por %p73, %p74
      %s77 = sadd.s32 %s76, 1
      %p80 = scmp.eq.s32.totalorder %s21, 1
      %p81 = scmp.ne.s32.totalorder %s76, %s78
      %p82 = scmp.eq.s32.totalorder %s21, 0
      %p83 = por %p81, %p82
      %p84 = scmp.ne.s32.totalorder %s76, %s78
      %p85 = scmp.eq.s32.totalorder %s26, 1
      %p86 = por %p84, %p85
      %p87 = scmp.ne.s32.totalorder %s78, %s79
      %p88 = scmp.eq.s32.totalorder %s26, 0
      %p89 = por %p87, %p88
      %p90 = scmp.ne.s32.totalorder %s78, %s79
      %p91 = scmp.eq.s32.totalorder %s27, 1
      %p92 = por %p90, %p91
      %p94 = scmp.ne.s32.totalorder %s79, %s93
      %p95 = scmp.eq.s32.totalorder %s27, 0
      %p96 = por %p94, %p95
      %s98 = sadd.s32 %s97, 1
      %p101 = scmp.eq.s32.totalorder %s21, 1
      %p102 = scmp.ne.s32.totalorder %s97, %s99
      %p103 = scmp.eq.s32.totalorder %s21, 0
      %p104 = por %p102, %p103
      %p105 = scmp.ne.s32.totalorder %s97, %s99
      %p106 = scmp.eq.s32.totalorder %s26, 1
      %p107 = por %p105, %p106
      %p108 = scmp.ne.s32.totalorder %s99, %s100
      %p109 = scmp.eq.s32.totalorder %s26, 0
      %p110 = por %p108, %p109
      %p111 = scmp.ne.s32.totalorder %s99, %s100
      %p112 = scmp.eq.s32.totalorder %s27, 1
      %p113 = por %p111, %p112
      %p115 = scmp.ne.s32.totalorder %s100, %s114
      %p116 = scmp.eq.s32.totalorder %s27, 0
      %p117 = por %p115, %p116
      %s119 = sadd.s32 %s118, 1
      %p122 = scmp.eq.s32.totalorder %s21, 1
      %p123 = scmp.ne.s32.totalorder %s118, %s120
      %p124 = scmp.eq.s32.totalorder %s21, 0
      %p125 = por %p123, %p124
      %p126 = scmp.ne.s32.totalorder %s118, %s120
      %p127 = scmp.eq.s32.totalorder %s26, 1
      %p128 = por %p126, %p127
      %p129 = scmp.ne.s32.totalorder %s120, %s121
      %p130 = scmp.eq.s32.totalorder %s26, 0
      %p131 = por %p129, %p130
      %p132 = scmp.ne.s32.totalorder %s120, %s121
      %p133 = scmp.eq.s32.totalorder %s27, 1
      %p134 = por %p132, %p133
      %p136 = scmp.ne.s32.totalorder %s121, %s135
      %p137 = scmp.eq.s32.totalorder %s27, 0
      %p138 = por %p136, %p137
      %s140 = sadd.s32 %s139, 1
      %p143 = scmp.eq.s32.totalorder %s21, 1
      %p144 = scmp.ne.s32.totalorder %s139, %s141
      %p145 = scmp.eq.s32.totalorder %s21, 0
      %p146 = por %p144, %p145
      %p147 = scmp.ne.s32.totalorder %s139, %s141
      %p148 = scmp.eq.s32.totalorder %s26, 1
      %p149 = por %p147, %p148
      %p150 = scmp.ne.s32.totalorder %s141, %s142
      %p151 = scmp.eq.s32.totalorder %s26, 0
      %p152 = por %p150, %p151
      %p153 = scmp.ne.s32.totalorder %s141, %s142
      %p154 = scmp.eq.s32.totalorder %s27, 1
      %p155 = por %p153, %p154
      %p157 = scmp.ne.s32.totalorder %s142, %s156
      %p158 = scmp.eq.s32.totalorder %s27, 0
      %p159 = por %p157, %p158
      %s161 = sadd.s32 %s160, 1
      %p164 = scmp.eq.s32.totalorder %s21, 1
      %p165 = scmp.ne.s32.totalorder %s160, %s162
      %p166 = scmp.eq.s32.totalorder %s21, 0
      %p167 = por %p165, %p166
      %p168 = scmp.ne.s32.totalorder %s160, %s162
      %p169 = scmp.eq.s32.totalorder %s26, 1
      %p170 = por %p168, %p169
      %p171 = scmp.ne.s32.totalorder %s162, %s163
      %p172 = scmp.eq.s32.totalorder %s26, 0
      %p173 = por %p171, %p172
      %p174 = scmp.ne.s32.totalorder %s162, %s163
      %p175 = scmp.eq.s32.totalorder %s27, 1
      %p176 = por %p174, %p175
      %p178 = scmp.ne.s32.totalorder %s163, %s177
      %p179 = scmp.eq.s32.totalorder %s27, 0
      %p180 = por %p178, %p179
      %s182 = sadd.s32 %s181, 1
      %p185 = scmp.eq.s32.totalorder %s21, 1
      %p186 = scmp.ne.s32.totalorder %s181, %s183
      %p187 = scmp.eq.s32.totalorder %s21, 0
      %p188 = por %p186, %p187
      %p189 = scmp.ne.s32.totalorder %s181, %s183
      %p190 = scmp.eq.s32.totalorder %s26, 1
      %p191 = por %p189, %p190
      %p192 = scmp.ne.s32.totalorder %s183, %s184
      %p193 = scmp.eq.s32.totalorder %s26, 0
      %p194 = por %p192, %p193
      %p195 = scmp.ne.s32.totalorder %s183, %s184
      %p196 = scmp.eq.s32.totalorder %s27, 1
      %p197 = por %p195, %p196
      %p199 = scmp.ne.s32.totalorder %s184, %s198
      %p200 = scmp.eq.s32.totalorder %s27, 0
      %p201 = por %p199, %p200
      %s202 = ssub.s32 %s21, %s28
      %p203 = scmp.eq.s32.totalorder %s202, 0
      %s205 = sadd.s32 %s204, 1
      %s206 = scalar_select %p203, %s204, %s205
      %p209 = pneg %p203
      %p210 = scmp.eq.s32.totalorder %s21, 1
      %p211 = por %p209, %p210
      %p212 = scmp.ne.s32.totalorder %s204, %s207
      %p213 = scmp.eq.s32.totalorder %s21, 0
      %p214 = por %p212, %p213
      %p215 = scmp.ne.s32.totalorder %s204, %s207
      %p216 = scmp.eq.s32.totalorder %s26, 1
      %p217 = por %p215, %p216
      %p218 = scmp.ne.s32.totalorder %s207, %s208
      %p219 = scmp.eq.s32.totalorder %s26, 0
      %p220 = por %p218, %p219
      %p221 = scmp.ne.s32.totalorder %s207, %s208
      %p222 = scmp.eq.s32.totalorder %s27, 1
      %p223 = por %p221, %p222
      %p225 = scmp.ne.s32.totalorder %s208, %s224
      %p226 = scmp.eq.s32.totalorder %s27, 0
      %p227 = por %p225, %p226
      %p228 = scmp.le.s32.totalorder 1, %s21
      %p229 = scmp.lt.s32.totalorder %s21, 3
      %p230 = pnand %p228, %p229
      %p231 = pneg %p230
      // Predicated region
      $region9: #{tpu_custom_call.1} parent=5 // pred_check
        _
      $region10: #{tpu_custom_call.1} parent=5 // pred_check_branch
        %233 = sbr.rel (%p230) target = $region12
      $region11: #{tpu_custom_call.1} parent=5 // pred_region
        %s234 = ssub.s32 %s21, 1
        // Predicated region
        $region13: #{tpu_custom_call.1} parent=11 // pred_check
          %p235 = pneg %p68
        $region14: #{tpu_custom_call.1} parent=11 // pred_check_branch
          %237 = sbr.rel (%p235) target = $region16
        $region15: #{tpu_custom_call.1} parent=11 // pred_region
          _
        $region16: #{tpu_custom_call.1} parent=11 // pred_fallthru
          _
        // Predicated region
        $region17: #{tpu_custom_call.1} parent=11 // pred_check
          %p238 = pneg %p89
        $region18: #{tpu_custom_call.1} parent=11 // pred_check_branch
          %240 = sbr.rel (%p238) target = $region20
        $region19: #{tpu_custom_call.1} parent=11 // pred_region
          _
        $region20: #{tpu_custom_call.1} parent=11 // pred_fallthru
          _
        // Predicated region
        $region21: #{tpu_custom_call.1} parent=11 // pred_check
          %p241 = pneg %p110
        $region22: #{tpu_custom_call.1} parent=11 // pred_check_branch
          %243 = sbr.rel (%p241) target = $region24
        $region23: #{tpu_custom_call.1} parent=11 // pred_region
          _
        $region24: #{tpu_custom_call.1} parent=11 // pred_fallthru
          _
        // Predicated region
        $region25: #{tpu_custom_call.1} parent=11 // pred_check
          %p244 = pneg %p131
        $region26: #{tpu_custom_call.1} parent=11 // pred_check_branch
          %246 = sbr.rel (%p244) target = $region28
        $region27: #{tpu_custom_call.1} parent=11 // pred_region
          _
        $region28: #{tpu_custom_call.1} parent=11 // pred_fallthru
          _
        // Predicated region
        $region29: #{tpu_custom_call.1} parent=11 // pred_check
          %p247 = pneg %p152
        $region30: #{tpu_custom_call.1} parent=11 // pred_check_branch
          %249 = sbr.rel (%p247) target = $region32
        $region31: #{tpu_custom_call.1} parent=11 // pred_region
          _
        $region32: #{tpu_custom_call.1} parent=11 // pred_fallthru
          _
        // Predicated region
        $region33: #{tpu_custom_call.1} parent=11 // pred_check
          %p250 = pneg %p173
        $region34: #{tpu_custom_call.1} parent=11 // pred_check_branch
          %252 = sbr.rel (%p250) target = $region36
        $region35: #{tpu_custom_call.1} parent=11 // pred_region
          _
        $region36: #{tpu_custom_call.1} parent=11 // pred_fallthru
          _
        // Predicated region
        $region37: #{tpu_custom_call.1} parent=11 // pred_check
          %p253 = pneg %p194
        $region38: #{tpu_custom_call.1} parent=11 // pred_check_branch
          %255 = sbr.rel (%p253) target = $region40
        $region39: #{tpu_custom_call.1} parent=11 // pred_region
          %257 = vsyncadd [#allocation7], 0
          %s259 = sshll.u32 %s7, 4
          %s260 = int_to_ptr.hbm [resolvable:$true] %s259
          %s261 = sshll.u32 [#allocation6], 4
          %s262 = int_to_ptr.vmem [resolvable:$true] %s261
          %264 = dma.hbm_to_vmem [thread:$0]  %s260, 256, %s262, [#allocation7]
        $region40: #{tpu_custom_call.1} parent=11 // pred_fallthru
          _
      $region12: #{tpu_custom_call.1} parent=5 // pred_fallthru
        _
      %p265 = scmp.lt.s32.totalorder %s21, 2
      // Predicated region
      $region41: #{tpu_custom_call.1} parent=5 // pred_check
        %p266 = pneg %p265
      $region42: #{tpu_custom_call.1} parent=5 // pred_check_branch
        %268 = sbr.rel (%p266) target = $region44
      $region43: #{tpu_custom_call.1} parent=5 // pred_region
        // Predicated region
        $region45: #{tpu_custom_call.1} parent=43 // pred_check
          %p269 = pneg %p41
        $region46: #{tpu_custom_call.1} parent=43 // pred_check_branch
          %271 = sbr.rel (%p269) target = $region48
        $region47: #{tpu_custom_call.1} parent=43 // pred_region
          %s272 = sand.u32 %s31, 1
          %s273 = scalar_lea.sflag [#allocation4], %s272
          %s274 = sand.u32 %s31, 1
          %s275 = smul.addr %s274, 16
          %s276 = scalar_lea.vmem [#allocation3], %s275
          %278 = vsyncadd %s273, 0
          %s279 = smul.addr %s21, 4
          %s280 = smul.addr %s279, 4
          %s281 = scalar_lea.hbm %s0, %s280
          %s283 = sshll.u32 %s281, 4
          %s284 = int_to_ptr.hbm [resolvable:$true] %s283
          %s285 = sshll.u32 %s276, 4
          %s286 = int_to_ptr.vmem [resolvable:$true] %s285
          %288 = dma.hbm_to_vmem [thread:$0]  %s284, 256, %s286, %s273
        $region48: #{tpu_custom_call.1} parent=43 // pred_fallthru
          _
      $region44: #{tpu_custom_call.1} parent=5 // pred_fallthru
        _
      %p289 = scmp.le.s32.totalorder 1, %s21
      %p290 = scmp.lt.s32.totalorder %s21, 3
      %p291 = pnand %p289, %p290
      %p292 = pneg %p291
      // Predicated region
      $region49: #{tpu_custom_call.1} parent=5 // pred_check
        _
      $region50: #{tpu_custom_call.1} parent=5 // pred_check_branch
        %294 = sbr.rel (%p291) target = $region52
      $region51: #{tpu_custom_call.1} parent=5 // pred_region
        %s295 = ssub.s32 %s21, 1
        %s296 = sand.u32 %s34, 1
        %s297 = scalar_lea.sflag [#allocation4], %s296
        %s298 = sand.u32 %s34, 1
        %s299 = smul.addr %s298, 16
        %s300 = scalar_lea.vmem [#allocation3], %s299
        // Predicated region
        $region53: #{tpu_custom_call.1} parent=51 // pred_check
          %p301 = pneg %p47
        $region54: #{tpu_custom_call.1} parent=51 // pred_check_branch
          %303 = sbr.rel (%p301) target = $region56
        $region55: #{tpu_custom_call.1} parent=51 // pred_region
          %305 = dma.done %s297, 256
        $region56: #{tpu_custom_call.1} parent=51 // pred_fallthru
          _
        // Predicated region
        $region57: #{tpu_custom_call.1} parent=51 // pred_check
          %p306 = pneg %p194
        $region58: #{tpu_custom_call.1} parent=51 // pred_check_branch
          %308 = sbr.rel (%p306) target = $region60
        $region59: #{tpu_custom_call.1} parent=51 // pred_region
          %310 = dma.done [#allocation7], 256
        $region60: #{tpu_custom_call.1} parent=51 // pred_fallthru
          _
        %s311 = sand.u32 %s34, 1
        %s312 = scalar_lea.sflag [#allocation4], %s311
        %s313 = sand.u32 %s34, 1
        %s314 = smul.addr %s313, 16
        %s315 = scalar_lea.vmem [#allocation3], %s314
        %p316 = pneg %p47
        %p317 = pneg %p44
        %p318 = pneg %p68
        %p319 = pneg %p65
        %p320 = pneg %p89
        %p321 = pneg %p86
        %p322 = pneg %p110
        %p323 = pneg %p107
        %p324 = pneg %p131
        %p325 = pneg %p128
        %p326 = pneg %p152
        %p327 = pneg %p149
        %p328 = pneg %p173
        %p329 = pneg %p170
        %p330 = pneg %p194
        %p331 = pneg %p191
        %p332 = pneg %p220
        %p333 = pneg %p217
        %s334 = sand.u32 %s207, 1
        %s335 = scalar_lea.sflag [#allocation5], %s334
        %s336 = sand.u32 %s207, 1
        %s337 = smul.addr %s336, 32
        %s338 = scalar_lea.vmem [#allocation8], %s337
        %v339 = vld [vmem:[%s300] sm:$0xff]
        %v340 = vld [vmem:[%s300 + $0x8] sm:$0xff]
        %v341 = vld [vmem:[%s1] sm:$0xf]
        %v342 = vld [vmem:[%s2] sm:$0xf]
        %344 = vset.pattern.permute.xlu0 0
        %345 = vperm.xlu0 %344, %v341
        %v346 = vpop.permute.xlu0 %345
        %v349 = vunpack.c.l.s4 839922192
        %v350 = vunpack.c.0.s8 %v349
        %v351 = vperm.slane %v346, %v350
        %v353 = vmul.f32 %v339, %v351
        %v354 = vmul.f32 %v340, %v351
        %356 = vset.pattern.permute.xlu0 0
        %357 = vperm.xlu0 %356, %v342
        %v358 = vpop.permute.xlu0 %357
        %v361 = vunpack.c.l.s4 839922192
        %v362 = vunpack.c.0.s8 %v361
        %v363 = vperm.slane %v358, %v362
        %v365 = vadd.f32 %v353, %v363
        %v366 = vadd.f32 %v354, %v363
        %v367 = vmax.f32 %v365, 0.0
        %v368 = vmax.f32 %v366, 0.0
        %v369 = vld [vmem:[%s3] sm:$0xf]
        %v370 = vld [vmem:[%s4] sm:$0xf]
        %372 = vset.pattern.permute.xlu0 0
        %373 = vperm.xlu0 %372, %v370
        %v374 = vpop.permute.xlu0 %373
        %378 = vst [vmem:[#allocation1] ss:$2 sm:$0xff] %v367
        %s379 = scalar_lea.vmem [#allocation1], 16
        %380 = vst [vmem:[%s379] ss:$2 sm:$0xff] %v368
        %v381 = vld.sshfl [vmem:[#allocation1] sm:$0xff pattern:$0x75316420]
        %v382 = vld.sshfl [vmem:[#allocation1 + $0x8] sm:$0xff pattern:$0x75316420]
        %v383 = vld.sshfl [vmem:[#allocation1 + $0x10] sm:$0xff pattern:$0x75316420]
        %v384 = vld.sshfl [vmem:[#allocation1 + $0x18] sm:$0xff pattern:$0x75316420]
        %vm385 = vcmask 31744
        %v387 = vsel %vm385, %v369, 0
        %vm389 = vcmask 1043456
        %v390 = vsel %vm389, %v381, 0
        %v392 = vsel %vm389, %v382, 0
        %v394 = vsel %vm389, %v383, 0
        %v396 = vsel %vm389, %v384, 0
        %398 = vmatpush.msra.mxu0 0.0
        %399 = vmatpush.msra.mxu0 0.0
        %400 = vmatpush.msra.mxu0 0.0
        %401 = vmatpush.msra.mxu0 0.0
        %402 = vmatpush.msra.mxu0 0.0
        %403 = vmatpush.msra.mxu0 0.0
        %404 = vmatpush.msra.mxu0 0.0
        %405 = vmatpush.msra.mxu0 0.0
        %406 = vmatpush.msra.mxu0 0.0
        %407 = vmatpush.msra.mxu0 0.0
        %408 = vmatpush.msra.mxu0 0.0
        %409 = vmatpush.msra.mxu0 0.0
        %410 = vmatpush.msra.mxu0 0.0
        %411 = vmatpush.msra.mxu0 0.0
        %412 = vmatpush.msra.mxu0 0.0
        %413 = vmatpush.msra.mxu0 %v390
        %414 = vmatmul.f32.gmra.mxu0 %v387
        %v415 = vpop.f32.mrf.mxu0
        %v416 = vadd.f32 %v374, %v415
        %417 = vdwg.mxu0
        %418 = vmatpush.msra.mxu0 0.0
        %419 = vmatpush.msra.mxu0 0.0
        %420 = vmatpush.msra.mxu0 0.0
        %421 = vmatpush.msra.mxu0 0.0
        %422 = vmatpush.msra.mxu0 0.0
        %423 = vmatpush.msra.mxu0 0.0
        %424 = vmatpush.msra.mxu0 0.0
        %425 = vmatpush.msra.mxu0 0.0
        %426 = vmatpush.msra.mxu0 0.0
        %427 = vmatpush.msra.mxu0 0.0
        %428 = vmatpush.msra.mxu0 0.0
        %429 = vmatpush.msra.mxu0 0.0
        %430 = vmatpush.msra.mxu0 0.0
        %431 = vmatpush.msra.mxu0 0.0
        %432 = vmatpush.msra.mxu0 0.0
        %433 = vmatpush.msra.mxu0 %v392
        %434 = vmatmul.f32.gmra.mxu0 %v387
        %v435 = vpop.f32.mrf.mxu0
        %v436 = vadd.f32 %v374, %v435
        %437 = vdwg.mxu0
        %438 = vmatpush.msra.mxu0 0.0
        %439 = vmatpush.msra.mxu0 0.0
        %440 = vmatpush.msra.mxu0 0.0
        %441 = vmatpush.msra.mxu0 0.0
        %442 = vmatpush.msra.mxu0 0.0
        %443 = vmatpush.msra.mxu0 0.0
        %444 = vmatpush.msra.mxu0 0.0
        %445 = vmatpush.msra.mxu0 0.0
        %446 = vmatpush.msra.mxu0 0.0
        %447 = vmatpush.msra.mxu0 0.0
        %448 = vmatpush.msra.mxu0 0.0
        %449 = vmatpush.msra.mxu0 0.0
        %450 = vmatpush.msra.mxu0 0.0
        %451 = vmatpush.msra.mxu0 0.0
        %452 = vmatpush.msra.mxu0 0.0
        %453 = vmatpush.msra.mxu0 %v394
        %454 = vmatmul.f32.gmra.mxu0 %v387
        %v455 = vpop.f32.mrf.mxu0
        %v456 = vadd.f32 %v374, %v455
        %457 = vdwg.mxu0
        %458 = vmatpush.msra.mxu0 0.0
        %459 = vmatpush.msra.mxu0 0.0
        %460 = vmatpush.msra.mxu0 0.0
        %461 = vmatpush.msra.mxu0 0.0
        %462 = vmatpush.msra.mxu0 0.0
        %463 = vmatpush.msra.mxu0 0.0
        %464 = vmatpush.msra.mxu0 0.0
        %465 = vmatpush.msra.mxu0 0.0
        %466 = vmatpush.msra.mxu0 0.0
        %467 = vmatpush.msra.mxu0 0.0
        %468 = vmatpush.msra.mxu0 0.0
        %469 = vmatpush.msra.mxu0 0.0
        %470 = vmatpush.msra.mxu0 0.0
        %471 = vmatpush.msra.mxu0 0.0
        %472 = vmatpush.msra.mxu0 0.0
        %473 = vmatpush.msra.mxu0 %v396
        %474 = vmatmul.f32.gmra.mxu0 %v387
        %v475 = vpop.f32.mrf.mxu0
        %v476 = vadd.f32 %v374, %v475
        %477 = vdwg.mxu0
        %v478 = vmul.f32 %v416, %v346
        %v479 = vmul.f32 %v436, %v346
        %v480 = vmul.f32 %v456, %v346
        %v481 = vmul.f32 %v476, %v346
        %v482 = vadd.f32 %v478, %v358
        %v483 = vadd.f32 %v479, %v358
        %v484 = vadd.f32 %v480, %v358
        %v485 = vadd.f32 %v481, %v358
        %v486 = vmax.f32 %v482, 0.0
        %v487 = vmax.f32 %v483, 0.0
        %v488 = vmax.f32 %v484, 0.0
        %v489 = vmax.f32 %v485, 0.0
        %v490 = vld [vmem:[#allocation6] sm:$0x77]
        %v491 = vld [vmem:[#allocation6 + $0x8] sm:$0x77]
        %492 = vst [vmem:[#allocation2 + $0x1a0] sm:$0xf0] 0.0
        %493 = vst [vmem:[#allocation2 + $0x1a8] sm:$0xf0] 0.0
        %494 = vst [vmem:[#allocation2 + $0x1b0] sm:$0xf0] 0.0
        %495 = vst [vmem:[#allocation2 + $0x1b8] sm:$0xf0] 0.0
        %496 = vst [vmem:[#allocation2 + $0x1c0] sm:$0xff] 0.0
        %497 = vst [vmem:[#allocation2 + $0x1c8] sm:$0xff] 0.0
        %498 = vst [vmem:[#allocation2 + $0x1d0] sm:$0xff] 0.0
        %499 = vst [vmem:[#allocation2 + $0x1d8] sm:$0xff] 0.0
        %500 = vst [vmem:[#allocation2 + $0x1e0] sm:$0xff] 0.0
        %501 = vst [vmem:[#allocation2 + $0x1e8] sm:$0xff] 0.0
        %502 = vst [vmem:[#allocation2 + $0x1f0] sm:$0xff] 0.0
        %503 = vst [vmem:[#allocation2 + $0x1f8] sm:$0xff] 0.0
        %504 = vrot.lane.b32.xlu0 %v486, 73
        %v505 = vpop.permute.xlu0 %504
        %506 = vrot.lane.b32.xlu0 %v487, 73
        %v507 = vpop.permute.xlu0 %506
        %508 = vrot.lane.b32.xlu0 %v488, 73
        %v509 = vpop.permute.xlu0 %508
        %510 = vrot.lane.b32.xlu0 %v489, 73
        %v511 = vpop.permute.xlu0 %510
        %v512 = vlaneseq
        %v513 = vand.u32 %v512, 127
        %vm514 = vcmp.lt.s32.totalorder %v513, 73
        %v515 = vsel %vm514, %v509, %v511
        %v516 = vsel %vm514, %v507, %v509
        %v517 = vsel %vm514, %v505, %v507
        %v518 = vsel %vm514, %v511, %v505
        %vm519 = vcmp.ge.s32.totalorder %v490, 1
        %vm520 = vcmp.ge.s32.totalorder %v491, 1
        %v521 = vsel %vm519, 1, 0
        %v522 = vsel %vm520, 1, 0
        %v523 = vrot.slane %v521, 5
        %v524 = vrot.slane %v523, 4
        %v525 = vrot.slane %v522, 5
        %v526 = vrot.slane %v525, 4
        %vm527 = vcmp.ne.s32.totalorder %v524, 0
        %vm528 = vcmp.ne.s32.totalorder %v526, 0
        %vm529 = vmand %vm519, %vm527
        %vm530 = vmand %vm520, %vm528
        %v531 = vrot.slane %v521, 6
        %v532 = vrot.slane %v531, 4
        %v533 = vrot.slane %v522, 6
        %v534 = vrot.slane %v533, 4
        %vm535 = vcmp.ne.s32.totalorder %v532, 0
        %vm536 = vcmp.ne.s32.totalorder %v534, 0
        %vm537 = vmand %vm529, %vm535
        %vm538 = vmand %vm530, %vm536
        %v539 = vsel %vm537, 1, 0
        %v540 = vsel %vm538, 1, 0
        %v541 = vperm.slane %v539, 0
        %v542 = vperm.slane %v539, 4
        %v543 = vperm.slane %v540, 0
        %v544 = vperm.slane %v540, 4
        %v545 = vperm.slane %v541, 0
        %v546 = vperm.slane %v542, 0
        %v547 = vperm.slane %v543, 0
        %v548 = vperm.slane %v544, 0
        %vm549 = vcmp.eq.s32.totalorder %v545, 1
        %vm550 = vcmp.eq.s32.totalorder %v546, 1
        %vm551 = vcmp.eq.s32.totalorder %v547, 1
        %vm552 = vcmp.eq.s32.totalorder %v548, 1
        %v553 = vsel %vm549, %v518, 0.0
        %v554 = vsel %vm550, %v517, 0.0
        %v555 = vsel %vm551, %v516, 0.0
        %v556 = vsel %vm552, %v515, 0.0
        %557 = vst [vmem:[#allocation2] sm:$0xf] %v553
        %558 = vst [vmem:[#allocation2 + $0x8] sm:$0xf] %v554
        %559 = vst [vmem:[#allocation2 + $0x10] sm:$0xf] %v555
        %560 = vst [vmem:[#allocation2 + $0x18] sm:$0xf] %v556
        %561 = vrot.lane.b32.xlu0 %v486, 72
        %v562 = vpop.permute.xlu0 %561
        %563 = vrot.lane.b32.xlu0 %v487, 72
        %v564 = vpop.permute.xlu0 %563
        %565 = vrot.lane.b32.xlu0 %v488, 72
        %v566 = vpop.permute.xlu0 %565
        %567 = vrot.lane.b32.xlu0 %v489, 72
        %v568 = vpop.permute.xlu0 %567
        %vm569 = vcmp.lt.s32.totalorder %v513, 72
        %v570 = vsel %vm569, %v566, %v568
        %v571 = vsel %vm569, %v564, %v566
        %v572 = vsel %vm569, %v562, %v564
        %v573 = vsel %vm569, %v568, %v562
        %v574 = vsel %vm529, 1, 0
        %v575 = vsel %vm530, 1, 0
        %v576 = vperm.slane %v574, 0
        %v577 = vperm.slane %v574, 4
        %v578 = vperm.slane %v575, 0
        %v579 = vperm.slane %v575, 4
        %v580 = vperm.slane %v576, 0
        %v581 = vperm.slane %v577, 0
        %v582 = vperm.slane %v578, 0
        %v583 = vperm.slane %v579, 0
        %vm584 = vcmp.eq.s32.totalorder %v580, 1
        %vm585 = vcmp.eq.s32.totalorder %v581, 1
        %vm586 = vcmp.eq.s32.totalorder %v582, 1
        %vm587 = vcmp.eq.s32.totalorder %v583, 1
        %v588 = vsel %vm584, %v573, 0.0
        %v589 = vsel %vm585, %v572, 0.0
        %v590 = vsel %vm586, %v571, 0.0
        %v591 = vsel %vm587, %v570, 0.0
        %v596 = vrot.slane %v588, 4
        %v597 = vrot.slane %v589, 4
        %v598 = vrot.slane %v590, 4
        %v599 = vrot.slane %v591, 4
        %604 = vst [vmem:[#allocation2] sm:$0xf0] %v596
        %605 = vst [vmem:[#allocation2 + $0x8] sm:$0xf0] %v597
        %606 = vst [vmem:[#allocation2 + $0x10] sm:$0xf0] %v598
        %607 = vst [vmem:[#allocation2 + $0x18] sm:$0xf0] %v599
        %608 = vrot.lane.b32.xlu0 %v486, 71
        %v609 = vpop.permute.xlu0 %608
        %610 = vrot.lane.b32.xlu0 %v487, 71
        %v611 = vpop.permute.xlu0 %610
        %612 = vrot.lane.b32.xlu0 %v488, 71
        %v613 = vpop.permute.xlu0 %612
        %614 = vrot.lane.b32.xlu0 %v489, 71
        %v615 = vpop.permute.xlu0 %614
        %vm616 = vcmp.lt.s32.totalorder %v513, 71
        %v617 = vsel %vm616, %v613, %v615
        %v618 = vsel %vm616, %v611, %v613
        %v619 = vsel %vm616, %v609, %v611
        %v620 = vsel %vm616, %v615, %v609
        %vm621 = vcmp.le.s32.totalorder %v490, 6
        %vm622 = vcmp.le.s32.totalorder %v491, 6
        %v623 = vsel %vm621, 1, 0
        %v624 = vsel %vm622, 1, 0
        %v625 = vrot.slane %v623, 6
        %v626 = vrot.slane %v625, 4
        %v627 = vrot.slane %v624, 6
        %v628 = vrot.slane %v627, 4
        %vm629 = vcmp.ne.s32.totalorder %v626, 0
        %vm630 = vcmp.ne.s32.totalorder %v628, 0
        %vm631 = vmand %vm529, %vm629
        %vm632 = vmand %vm530, %vm630
        %v633 = vsel %vm631, 1, 0
        %v634 = vsel %vm632, 1, 0
        %v635 = vperm.slane %v633, 0
        %v636 = vperm.slane %v633, 4
        %v637 = vperm.slane %v634, 0
        %v638 = vperm.slane %v634, 4
        %v639 = vperm.slane %v635, 0
        %v640 = vperm.slane %v636, 0
        %v641 = vperm.slane %v637, 0
        %v642 = vperm.slane %v638, 0
        %vm643 = vcmp.eq.s32.totalorder %v639, 1
        %vm644 = vcmp.eq.s32.totalorder %v640, 1
        %vm645 = vcmp.eq.s32.totalorder %v641, 1
        %vm646 = vcmp.eq.s32.totalorder %v642, 1
        %v647 = vsel %vm643, %v620, 0.0
        %v648 = vsel %vm644, %v619, 0.0
        %v649 = vsel %vm645, %v618, 0.0
        %v650 = vsel %vm646, %v617, 0.0
        %651 = vst [vmem:[#allocation2 + $0x20] sm:$0xf] %v647
        %652 = vst [vmem:[#allocation2 + $0x28] sm:$0xf] %v648
        %653 = vst [vmem:[#allocation2 + $0x30] sm:$0xf] %v649
        %654 = vst [vmem:[#allocation2 + $0x38] sm:$0xf] %v650
        %655 = vrot.lane.b32.xlu0 %v486, 65
        %v656 = vpop.permute.xlu0 %655
        %657 = vrot.lane.b32.xlu0 %v487, 65
        %v658 = vpop.permute.xlu0 %657
        %659 = vrot.lane.b32.xlu0 %v488, 65
        %v660 = vpop.permute.xlu0 %659
        %661 = vrot.lane.b32.xlu0 %v489, 65
        %v662 = vpop.permute.xlu0 %661
        %vm663 = vcmp.lt.s32.totalorder %v513, 65
        %v664 = vsel %vm663, %v660, %v662
        %v665 = vsel %vm663, %v658, %v660
        %v666 = vsel %vm663, %v656, %v658
        %v667 = vsel %vm663, %v662, %v656
        %vm668 = vmand %vm519, %vm535
        %vm669 = vmand %vm520, %vm536
        %v670 = vsel %vm668, 1, 0
        %v671 = vsel %vm669, 1, 0
        %v672 = vperm.slane %v670, 0
        %v673 = vperm.slane %v670, 4
        %v674 = vperm.slane %v671, 0
        %v675 = vperm.slane %v671, 4
        %v676 = vperm.slane %v672, 0
        %v677 = vperm.slane %v673, 0
        %v678 = vperm.slane %v674, 0
        %v679 = vperm.slane %v675, 0
        %vm680 = vcmp.eq.s32.totalorder %v676, 1
        %vm681 = vcmp.eq.s32.totalorder %v677, 1
        %vm682 = vcmp.eq.s32.totalorder %v678, 1
        %vm683 = vcmp.eq.s32.totalorder %v679, 1
        %v684 = vsel %vm680, %v667, 0.0
        %v685 = vsel %vm681, %v666, 0.0
        %v686 = vsel %vm682, %v665, 0.0
        %v687 = vsel %vm683, %v664, 0.0
        %v692 = vrot.slane %v684, 4
        %v693 = vrot.slane %v685, 4
        %v694 = vrot.slane %v686, 4
        %v695 = vrot.slane %v687, 4
        %700 = vst [vmem:[#allocation2 + $0x20] sm:$0xf0] %v692
        %701 = vst [vmem:[#allocation2 + $0x28] sm:$0xf0] %v693
        %702 = vst [vmem:[#allocation2 + $0x30] sm:$0xf0] %v694
        %703 = vst [vmem:[#allocation2 + $0x38] sm:$0xf0] %v695
        %704 = vrot.lane.b32.xlu0 %v486, 64
        %v705 = vpop.permute.xlu0 %704
        %706 = vrot.lane.b32.xlu0 %v487, 64
        %v707 = vpop.permute.xlu0 %706
        %708 = vrot.lane.b32.xlu0 %v488, 64
        %v709 = vpop.permute.xlu0 %708
        %710 = vrot.lane.b32.xlu0 %v489, 64
        %v711 = vpop.permute.xlu0 %710
        %vm712 = vcmp.lt.s32.totalorder %v513, 64
        %v713 = vsel %vm712, %v709, %v711
        %v714 = vsel %vm712, %v707, %v709
        %v715 = vsel %vm712, %v705, %v707
        %v716 = vsel %vm712, %v711, %v705
        %v717 = vperm.slane %v521, 0
        %v718 = vperm.slane %v521, 4
        %v719 = vperm.slane %v522, 0
        %v720 = vperm.slane %v522, 4
        %v721 = vperm.slane %v717, 0
        %v722 = vperm.slane %v718, 0
        %v723 = vperm.slane %v719, 0
        %v724 = vperm.slane %v720, 0
        %vm725 = vcmp.eq.s32.totalorder %v721, 1
        %vm726 = vcmp.eq.s32.totalorder %v722, 1
        %vm727 = vcmp.eq.s32.totalorder %v723, 1
        %vm728 = vcmp.eq.s32.totalorder %v724, 1
        %v729 = vsel %vm725, %v716, 0.0
        %v730 = vsel %vm726, %v715, 0.0
        %v731 = vsel %vm727, %v714, 0.0
        %v732 = vsel %vm728, %v713, 0.0
        %733 = vst [vmem:[#allocation2 + $0x40] sm:$0xf] %v729
        %734 = vst [vmem:[#allocation2 + $0x48] sm:$0xf] %v730
        %735 = vst [vmem:[#allocation2 + $0x50] sm:$0xf] %v731
        %736 = vst [vmem:[#allocation2 + $0x58] sm:$0xf] %v732
        %737 = vrot.lane.b32.xlu0 %v486, 63
        %v738 = vpop.permute.xlu0 %737
        %739 = vrot.lane.b32.xlu0 %v487, 63
        %v740 = vpop.permute.xlu0 %739
        %741 = vrot.lane.b32.xlu0 %v488, 63
        %v742 = vpop.permute.xlu0 %741
        %743 = vrot.lane.b32.xlu0 %v489, 63
        %v744 = vpop.permute.xlu0 %743
        %vm745 = vcmp.lt.s32.totalorder %v513, 63
        %v746 = vsel %vm745, %v742, %v744
        %v747 = vsel %vm745, %v740, %v742
        %v748 = vsel %vm745, %v738, %v740
        %v749 = vsel %vm745, %v744, %v738
        %vm750 = vmand %vm519, %vm629
        %vm751 = vmand %vm520, %vm630
        %v752 = vsel %vm750, 1, 0
        %v753 = vsel %vm751, 1, 0
        %v754 = vperm.slane %v752, 0
        %v755 = vperm.slane %v752, 4
        %v756 = vperm.slane %v753, 0
        %v757 = vperm.slane %v753, 4
        %v758 = vperm.slane %v754, 0
        %v759 = vperm.slane %v755, 0
        %v760 = vperm.slane %v756, 0
        %v761 = vperm.slane %v757, 0
        %vm762 = vcmp.eq.s32.totalorder %v758, 1
        %vm763 = vcmp.eq.s32.totalorder %v759, 1
        %vm764 = vcmp.eq.s32.totalorder %v760, 1
        %vm765 = vcmp.eq.s32.totalorder %v761, 1
        %v766 = vsel %vm762, %v749, 0.0
        %v767 = vsel %vm763, %v748, 0.0
        %v768 = vsel %vm764, %v747, 0.0
        %v769 = vsel %vm765, %v746, 0.0
        %v774 = vrot.slane %v766, 4
        %v775 = vrot.slane %v767, 4
        %v776 = vrot.slane %v768, 4
        %v777 = vrot.slane %v769, 4
        %782 = vst [vmem:[#allocation2 + $0x40] sm:$0xf0] %v774
        %783 = vst [vmem:[#allocation2 + $0x48] sm:$0xf0] %v775
        %784 = vst [vmem:[#allocation2 + $0x50] sm:$0xf0] %v776
        %785 = vst [vmem:[#allocation2 + $0x58] sm:$0xf0] %v777
        %786 = vrot.lane.b32.xlu0 %v486, 57
        %v787 = vpop.permute.xlu0 %786
        %788 = vrot.lane.b32.xlu0 %v487, 57
        %v789 = vpop.permute.xlu0 %788
        %790 = vrot.lane.b32.xlu0 %v488, 57
        %v791 = vpop.permute.xlu0 %790
        %792 = vrot.lane.b32.xlu0 %v489, 57
        %v793 = vpop.permute.xlu0 %792
        %vm794 = vcmp.lt.s32.totalorder %v513, 57
        %v795 = vsel %vm794, %v791, %v793
        %v796 = vsel %vm794, %v789, %v791
        %v797 = vsel %vm794, %v787, %v789
        %v798 = vsel %vm794, %v793, %v787
        %v799 = vrot.slane %v623, 5
        %v800 = vrot.slane %v799, 4
        %v801 = vrot.slane %v624, 5
        %v802 = vrot.slane %v801, 4
        %vm803 = vcmp.ne.s32.totalorder %v800, 0
        %vm804 = vcmp.ne.s32.totalorder %v802, 0
        %vm805 = vmand %vm519, %vm803
        %vm806 = vmand %vm520, %vm804
        %vm807 = vmand %vm805, %vm535
        %vm808 = vmand %vm806, %vm536
        %v809 = vsel %vm807, 1, 0
        %v810 = vsel %vm808, 1, 0
        %v811 = vperm.slane %v809, 0
        %v812 = vperm.slane %v809, 4
        %v813 = vperm.slane %v810, 0
        %v814 = vperm.slane %v810, 4
        %v815 = vperm.slane %v811, 0
        %v816 = vperm.slane %v812, 0
        %v817 = vperm.slane %v813, 0
        %v818 = vperm.slane %v814, 0
        %vm819 = vcmp.eq.s32.totalorder %v815, 1
        %vm820 = vcmp.eq.s32.totalorder %v816, 1
        %vm821 = vcmp.eq.s32.totalorder %v817, 1
        %vm822 = vcmp.eq.s32.totalorder %v818, 1
        %v823 = vsel %vm819, %v798, 0.0
        %v824 = vsel %vm820, %v797, 0.0
        %v825 = vsel %vm821, %v796, 0.0
        %v826 = vsel %vm822, %v795, 0.0
        %827 = vst [vmem:[#allocation2 + $0x60] sm:$0xf] %v823
        %828 = vst [vmem:[#allocation2 + $0x68] sm:$0xf] %v824
        %829 = vst [vmem:[#allocation2 + $0x70] sm:$0xf] %v825
        %830 = vst [vmem:[#allocation2 + $0x78] sm:$0xf] %v826
        %831 = vrot.lane.b32.xlu0 %v486, 56
        %v832 = vpop.permute.xlu0 %831
        %833 = vrot.lane.b32.xlu0 %v487, 56
        %v834 = vpop.permute.xlu0 %833
        %835 = vrot.lane.b32.xlu0 %v488, 56
        %v836 = vpop.permute.xlu0 %835
        %837 = vrot.lane.b32.xlu0 %v489, 56
        %v838 = vpop.permute.xlu0 %837
        %vm839 = vcmp.lt.s32.totalorder %v513, 56
        %v840 = vsel %vm839, %v836, %v838
        %v841 = vsel %vm839, %v834, %v836
        %v842 = vsel %vm839, %v832, %v834
        %v843 = vsel %vm839, %v838, %v832
        %v844 = vsel %vm805, 1, 0
        %v845 = vsel %vm806, 1, 0
        %v846 = vperm.slane %v844, 0
        %v847 = vperm.slane %v844, 4
        %v848 = vperm.slane %v845, 0
        %v849 = vperm.slane %v845, 4
        %v850 = vperm.slane %v846, 0
        %v851 = vperm.slane %v847, 0
        %v852 = vperm.slane %v848, 0
        %v853 = vperm.slane %v849, 0
        %vm854 = vcmp.eq.s32.totalorder %v850, 1
        %vm855 = vcmp.eq.s32.totalorder %v851, 1
        %vm856 = vcmp.eq.s32.totalorder %v852, 1
        %vm857 = vcmp.eq.s32.totalorder %v853, 1
        %v858 = vsel %vm854, %v843, 0.0
        %v859 = vsel %vm855, %v842, 0.0
        %v860 = vsel %vm856, %v841, 0.0
        %v861 = vsel %vm857, %v840, 0.0
        %v866 = vrot.slane %v858, 4
        %v867 = vrot.slane %v859, 4
        %v868 = vrot.slane %v860, 4
        %v869 = vrot.slane %v861, 4
        %874 = vst [vmem:[#allocation2 + $0x60] sm:$0xf0] %v866
        %875 = vst [vmem:[#allocation2 + $0x68] sm:$0xf0] %v867
        %876 = vst [vmem:[#allocation2 + $0x70] sm:$0xf0] %v868
        %877 = vst [vmem:[#allocation2 + $0x78] sm:$0xf0] %v869
        %878 = vrot.lane.b32.xlu0 %v486, 55
        %v879 = vpop.permute.xlu0 %878
        %880 = vrot.lane.b32.xlu0 %v487, 55
        %v881 = vpop.permute.xlu0 %880
        %882 = vrot.lane.b32.xlu0 %v488, 55
        %v883 = vpop.permute.xlu0 %882
        %884 = vrot.lane.b32.xlu0 %v489, 55
        %v885 = vpop.permute.xlu0 %884
        %vm886 = vcmp.lt.s32.totalorder %v513, 55
        %v887 = vsel %vm886, %v883, %v885
        %v888 = vsel %vm886, %v881, %v883
        %v889 = vsel %vm886, %v879, %v881
        %v890 = vsel %vm886, %v885, %v879
        %vm891 = vmand %vm805, %vm629
        %vm892 = vmand %vm806, %vm630
        %v893 = vsel %vm891, 1, 0
        %v894 = vsel %vm892, 1, 0
        %v895 = vperm.slane %v893, 0
        %v896 = vperm.slane %v893, 4
        %v897 = vperm.slane %v894, 0
        %v898 = vperm.slane %v894, 4
        %v899 = vperm.slane %v895, 0
        %v900 = vperm.slane %v896, 0
        %v901 = vperm.slane %v897, 0
        %v902 = vperm.slane %v898, 0
        %vm903 = vcmp.eq.s32.totalorder %v899, 1
        %vm904 = vcmp.eq.s32.totalorder %v900, 1
        %vm905 = vcmp.eq.s32.totalorder %v901, 1
        %vm906 = vcmp.eq.s32.totalorder %v902, 1
        %v907 = vsel %vm903, %v890, 0.0
        %v908 = vsel %vm904, %v889, 0.0
        %v909 = vsel %vm905, %v888, 0.0
        %v910 = vsel %vm906, %v887, 0.0
        %911 = vst [vmem:[#allocation2 + $0x80] sm:$0xf] %v907
        %912 = vst [vmem:[#allocation2 + $0x88] sm:$0xf] %v908
        %913 = vst [vmem:[#allocation2 + $0x90] sm:$0xf] %v909
        %914 = vst [vmem:[#allocation2 + $0x98] sm:$0xf] %v910
        %915 = vrot.lane.b32.xlu0 %v486, 9
        %v916 = vpop.permute.xlu0 %915
        %917 = vrot.lane.b32.xlu0 %v487, 9
        %v918 = vpop.permute.xlu0 %917
        %919 = vrot.lane.b32.xlu0 %v488, 9
        %v920 = vpop.permute.xlu0 %919
        %921 = vrot.lane.b32.xlu0 %v489, 9
        %v922 = vpop.permute.xlu0 %921
        %vm923 = vcmp.lt.s32.totalorder %v513, 9
        %v924 = vsel %vm923, %v920, %v922
        %v925 = vsel %vm923, %v918, %v920
        %v926 = vsel %vm923, %v916, %v918
        %v927 = vsel %vm923, %v922, %v916
        %v928 = vperm.slane %v574, 1
        %v929 = vperm.slane %v574, 5
        %v930 = vperm.slane %v575, 1
        %v931 = vperm.slane %v575, 5
        %v932 = vperm.slane %v928, 1
        %v933 = vperm.slane %v929, 1
        %v934 = vperm.slane %v930, 1
        %v935 = vperm.slane %v931, 1
        %vm936 = vcmp.eq.s32.totalorder %v932, 1
        %vm937 = vcmp.eq.s32.totalorder %v933, 1
        %vm938 = vcmp.eq.s32.totalorder %v934, 1
        %vm939 = vcmp.eq.s32.totalorder %v935, 1
        %v940 = vsel %vm936, %v927, 0.0
        %v941 = vsel %vm937, %v926, 0.0
        %v942 = vsel %vm938, %v925, 0.0
        %v943 = vsel %vm939, %v924, 0.0
        %v948 = vrot.slane %v940, 4
        %v949 = vrot.slane %v941, 4
        %v950 = vrot.slane %v942, 4
        %v951 = vrot.slane %v943, 4
        %956 = vst [vmem:[#allocation2 + $0x80] sm:$0xf0] %v948
        %957 = vst [vmem:[#allocation2 + $0x88] sm:$0xf0] %v949
        %958 = vst [vmem:[#allocation2 + $0x90] sm:$0xf0] %v950
        %959 = vst [vmem:[#allocation2 + $0x98] sm:$0xf0] %v951
        %960 = vrot.lane.b32.xlu0 %v486, 8
        %v961 = vpop.permute.xlu0 %960
        %962 = vrot.lane.b32.xlu0 %v487, 8
        %v963 = vpop.permute.xlu0 %962
        %964 = vrot.lane.b32.xlu0 %v488, 8
        %v965 = vpop.permute.xlu0 %964
        %966 = vrot.lane.b32.xlu0 %v489, 8
        %v967 = vpop.permute.xlu0 %966
        %vm968 = vcmp.lt.s32.totalorder %v513, 8
        %v969 = vsel %vm968, %v965, %v967
        %v970 = vsel %vm968, %v963, %v965
        %v971 = vsel %vm968, %v961, %v963
        %v972 = vsel %vm968, %v967, %v961
        %v973 = vperm.slane %v521, 1
        %v974 = vperm.slane %v521, 5
        %v975 = vperm.slane %v522, 1
        %v976 = vperm.slane %v522, 5
        %v977 = vperm.slane %v973, 1
        %v978 = vperm.slane %v974, 1
        %v979 = vperm.slane %v975, 1
        %v980 = vperm.slane %v976, 1
        %vm981 = vcmp.eq.s32.totalorder %v977, 1
        %vm982 = vcmp.eq.s32.totalorder %v978, 1
        %vm983 = vcmp.eq.s32.totalorder %v979, 1
        %vm984 = vcmp.eq.s32.totalorder %v980, 1
        %v985 = vsel %vm981, %v972, 0.0
        %v986 = vsel %vm982, %v971, 0.0
        %v987 = vsel %vm983, %v970, 0.0
        %v988 = vsel %vm984, %v969, 0.0
        %989 = vst [vmem:[#allocation2 + $0xa0] sm:$0xf] %v985
        %990 = vst [vmem:[#allocation2 + $0xa8] sm:$0xf] %v986
        %991 = vst [vmem:[#allocation2 + $0xb0] sm:$0xf] %v987
        %992 = vst [vmem:[#allocation2 + $0xb8] sm:$0xf] %v988
        %993 = vrot.lane.b32.xlu0 %v486, 7
        %v994 = vpop.permute.xlu0 %993
        %995 = vrot.lane.b32.xlu0 %v487, 7
        %v996 = vpop.permute.xlu0 %995
        %997 = vrot.lane.b32.xlu0 %v488, 7
        %v998 = vpop.permute.xlu0 %997
        %999 = vrot.lane.b32.xlu0 %v489, 7
        %v1000 = vpop.permute.xlu0 %999
        %vm1001 = vcmp.lt.s32.totalorder %v513, 7
        %v1002 = vsel %vm1001, %v998, %v1000
        %v1003 = vsel %vm1001, %v996, %v998
        %v1004 = vsel %vm1001, %v994, %v996
        %v1005 = vsel %vm1001, %v1000, %v994
        %v1006 = vperm.slane %v844, 1
        %v1007 = vperm.slane %v844, 5
        %v1008 = vperm.slane %v845, 1
        %v1009 = vperm.slane %v845, 5
        %v1010 = vperm.slane %v1006, 1
        %v1011 = vperm.slane %v1007, 1
        %v1012 = vperm.slane %v1008, 1
        %v1013 = vperm.slane %v1009, 1
        %vm1014 = vcmp.eq.s32.totalorder %v1010, 1
        %vm1015 = vcmp.eq.s32.totalorder %v1011, 1
        %vm1016 = vcmp.eq.s32.totalorder %v1012, 1
        %vm1017 = vcmp.eq.s32.totalorder %v1013, 1
        %v1018 = vsel %vm1014, %v1005, 0.0
        %v1019 = vsel %vm1015, %v1004, 0.0
        %v1020 = vsel %vm1016, %v1003, 0.0
        %v1021 = vsel %vm1017, %v1002, 0.0
        %v1026 = vrot.slane %v1018, 4
        %v1027 = vrot.slane %v1019, 4
        %v1028 = vrot.slane %v1020, 4
        %v1029 = vrot.slane %v1021, 4
        %1034 = vst [vmem:[#allocation2 + $0xa0] sm:$0xf0] %v1026
        %1035 = vst [vmem:[#allocation2 + $0xa8] sm:$0xf0] %v1027
        %1036 = vst [vmem:[#allocation2 + $0xb0] sm:$0xf0] %v1028
        %1037 = vst [vmem:[#allocation2 + $0xb8] sm:$0xf0] %v1029
        %1038 = vrot.lane.b32.xlu0 %v486, 1
        %v1039 = vpop.permute.xlu0 %1038
        %1040 = vrot.lane.b32.xlu0 %v487, 1
        %v1041 = vpop.permute.xlu0 %1040
        %1042 = vrot.lane.b32.xlu0 %v488, 1
        %v1043 = vpop.permute.xlu0 %1042
        %1044 = vrot.lane.b32.xlu0 %v489, 1
        %v1045 = vpop.permute.xlu0 %1044
        %vm1046 = vcmp.lt.s32.totalorder %v513, 1
        %v1047 = vsel %vm1046, %v1043, %v1045
        %v1048 = vsel %vm1046, %v1041, %v1043
        %v1049 = vsel %vm1046, %v1039, %v1041
        %v1050 = vsel %vm1046, %v1045, %v1039
        %v1051 = vperm.slane %v521, 2
        %v1052 = vperm.slane %v521, 6
        %v1053 = vperm.slane %v522, 2
        %v1054 = vperm.slane %v522, 6
        %v1055 = vperm.slane %v1051, 2
        %v1056 = vperm.slane %v1052, 2
        %v1057 = vperm.slane %v1053, 2
        %v1058 = vperm.slane %v1054, 2
        %vm1059 = vcmp.eq.s32.totalorder %v1055, 1
        %vm1060 = vcmp.eq.s32.totalorder %v1056, 1
        %vm1061 = vcmp.eq.s32.totalorder %v1057, 1
        %vm1062 = vcmp.eq.s32.totalorder %v1058, 1
        %v1063 = vsel %vm1059, %v1050, 0.0
        %v1064 = vsel %vm1060, %v1049, 0.0
        %v1065 = vsel %vm1061, %v1048, 0.0
        %v1066 = vsel %vm1062, %v1047, 0.0
        %1067 = vst [vmem:[#allocation2 + $0xc0] sm:$0xf] %v1063
        %1068 = vst [vmem:[#allocation2 + $0xc8] sm:$0xf] %v1064
        %1069 = vst [vmem:[#allocation2 + $0xd0] sm:$0xf] %v1065
        %1070 = vst [vmem:[#allocation2 + $0xd8] sm:$0xf] %v1066
        %v1075 = vrot.slane %v486, 4
        %v1076 = vrot.slane %v487, 4
        %v1077 = vrot.slane %v488, 4
        %v1078 = vrot.slane %v489, 4
        %1083 = vst [vmem:[#allocation2 + $0xc0] sm:$0xf0] %v1075
        %1084 = vst [vmem:[#allocation2 + $0xc8] sm:$0xf0] %v1076
        %1085 = vst [vmem:[#allocation2 + $0xd0] sm:$0xf0] %v1077
        %1086 = vst [vmem:[#allocation2 + $0xd8] sm:$0xf0] %v1078
        %1087 = vrot.lane.b32.xlu0 %v486, 127
        %v1088 = vpop.permute.xlu0 %1087
        %1089 = vrot.lane.b32.xlu0 %v487, 127
        %v1090 = vpop.permute.xlu0 %1089
        %1091 = vrot.lane.b32.xlu0 %v488, 127
        %v1092 = vpop.permute.xlu0 %1091
        %1093 = vrot.lane.b32.xlu0 %v489, 127
        %v1094 = vpop.permute.xlu0 %1093
        %vm1095 = vcmp.lt.s32.totalorder %v513, 127
        %v1096 = vsel %vm1095, %v1092, %v1094
        %v1097 = vsel %vm1095, %v1090, %v1092
        %v1098 = vsel %vm1095, %v1088, %v1090
        %v1099 = vsel %vm1095, %v1094, %v1088
        %v1100 = vperm.slane %v623, 2
        %v1101 = vperm.slane %v623, 6
        %v1102 = vperm.slane %v624, 2
        %v1103 = vperm.slane %v624, 6
        %v1104 = vperm.slane %v1100, 2
        %v1105 = vperm.slane %v1101, 2
        %v1106 = vperm.slane %v1102, 2
        %v1107 = vperm.slane %v1103, 2
        %vm1108 = vcmp.eq.s32.totalorder %v1104, 1
        %vm1109 = vcmp.eq.s32.totalorder %v1105, 1
        %vm1110 = vcmp.eq.s32.totalorder %v1106, 1
        %vm1111 = vcmp.eq.s32.totalorder %v1107, 1
        %v1112 = vsel %vm1108, %v1098, 0.0
        %v1113 = vsel %vm1109, %v1097, 0.0
        %v1114 = vsel %vm1110, %v1096, 0.0
        %v1115 = vsel %vm1111, %v1099, 0.0
        %1116 = vst [vmem:[#allocation2 + $0xe0] sm:$0xf] %v1112
        %1117 = vst [vmem:[#allocation2 + $0xe8] sm:$0xf] %v1113
        %1118 = vst [vmem:[#allocation2 + $0xf0] sm:$0xf] %v1114
        %1119 = vst [vmem:[#allocation2 + $0xf8] sm:$0xf] %v1115
        %1120 = vrot.lane.b32.xlu0 %v486, 121
        %v1121 = vpop.permute.xlu0 %1120
        %1122 = vrot.lane.b32.xlu0 %v487, 121
        %v1123 = vpop.permute.xlu0 %1122
        %1124 = vrot.lane.b32.xlu0 %v488, 121
        %v1125 = vpop.permute.xlu0 %1124
        %1126 = vrot.lane.b32.xlu0 %v489, 121
        %v1127 = vpop.permute.xlu0 %1126
        %vm1128 = vcmp.lt.s32.totalorder %v513, 121
        %v1129 = vsel %vm1128, %v1125, %v1127
        %v1130 = vsel %vm1128, %v1123, %v1125
        %v1131 = vsel %vm1128, %v1121, %v1123
        %v1132 = vsel %vm1128, %v1127, %v1121
        %vm1133 = vmand %vm621, %vm527
        %vm1134 = vmand %vm622, %vm528
        %v1135 = vsel %vm1133, 1, 0
        %v1136 = vsel %vm1134, 1, 0
        %v1137 = vperm.slane %v1135, 1
        %v1138 = vperm.slane %v1135, 5
        %v1139 = vperm.slane %v1136, 1
        %v1140 = vperm.slane %v1136, 5
        %v1141 = vperm.slane %v1137, 1
        %v1142 = vperm.slane %v1138, 1
        %v1143 = vperm.slane %v1139, 1
        %v1144 = vperm.slane %v1140, 1
        %vm1145 = vcmp.eq.s32.totalorder %v1141, 1
        %vm1146 = vcmp.eq.s32.totalorder %v1142, 1
        %vm1147 = vcmp.eq.s32.totalorder %v1143, 1
        %vm1148 = vcmp.eq.s32.totalorder %v1144, 1
        %v1149 = vsel %vm1145, %v1131, 0.0
        %v1150 = vsel %vm1146, %v1130, 0.0
        %v1151 = vsel %vm1147, %v1129, 0.0
        %v1152 = vsel %vm1148, %v1132, 0.0
        %v1157 = vrot.slane %v1149, 4
        %v1158 = vrot.slane %v1150, 4
        %v1159 = vrot.slane %v1151, 4
        %v1160 = vrot.slane %v1152, 4
        %1165 = vst [vmem:[#allocation2 + $0xe0] sm:$0xf0] %v1157
        %1166 = vst [vmem:[#allocation2 + $0xe8] sm:$0xf0] %v1158
        %1167 = vst [vmem:[#allocation2 + $0xf0] sm:$0xf0] %v1159
        %1168 = vst [vmem:[#allocation2 + $0xf8] sm:$0xf0] %v1160
        %1169 = vrot.lane.b32.xlu0 %v486, 120
        %v1170 = vpop.permute.xlu0 %1169
        %1171 = vrot.lane.b32.xlu0 %v487, 120
        %v1172 = vpop.permute.xlu0 %1171
        %1173 = vrot.lane.b32.xlu0 %v488, 120
        %v1174 = vpop.permute.xlu0 %1173
        %1175 = vrot.lane.b32.xlu0 %v489, 120
        %v1176 = vpop.permute.xlu0 %1175
        %vm1177 = vcmp.lt.s32.totalorder %v513, 120
        %v1178 = vsel %vm1177, %v1174, %v1176
        %v1179 = vsel %vm1177, %v1172, %v1174
        %v1180 = vsel %vm1177, %v1170, %v1172
        %v1181 = vsel %vm1177, %v1176, %v1170
        %v1182 = vperm.slane %v623, 1
        %v1183 = vperm.slane %v623, 5
        %v1184 = vperm.slane %v624, 1
        %v1185 = vperm.slane %v624, 5
        %v1186 = vperm.slane %v1182, 1
        %v1187 = vperm.slane %v1183, 1
        %v1188 = vperm.slane %v1184, 1
        %v1189 = vperm.slane %v1185, 1
        %vm1190 = vcmp.eq.s32.totalorder %v1186, 1
        %vm1191 = vcmp.eq.s32.totalorder %v1187, 1
        %vm1192 = vcmp.eq.s32.totalorder %v1188, 1
        %vm1193 = vcmp.eq.s32.totalorder %v1189, 1
        %v1194 = vsel %vm1190, %v1180, 0.0
        %v1195 = vsel %vm1191, %v1179, 0.0
        %v1196 = vsel %vm1192, %v1178, 0.0
        %v1197 = vsel %vm1193, %v1181, 0.0
        %1198 = vst [vmem:[#allocation2 + $0x100] sm:$0xf] %v1194
        %1199 = vst [vmem:[#allocation2 + $0x108] sm:$0xf] %v1195
        %1200 = vst [vmem:[#allocation2 + $0x110] sm:$0xf] %v1196
        %1201 = vst [vmem:[#allocation2 + $0x118] sm:$0xf] %v1197
        %1202 = vrot.lane.b32.xlu0 %v486, 119
        %v1203 = vpop.permute.xlu0 %1202
        %1204 = vrot.lane.b32.xlu0 %v487, 119
        %v1205 = vpop.permute.xlu0 %1204
        %1206 = vrot.lane.b32.xlu0 %v488, 119
        %v1207 = vpop.permute.xlu0 %1206
        %1208 = vrot.lane.b32.xlu0 %v489, 119
        %v1209 = vpop.permute.xlu0 %1208
        %vm1210 = vcmp.lt.s32.totalorder %v513, 119
        %v1211 = vsel %vm1210, %v1207, %v1209
        %v1212 = vsel %vm1210, %v1205, %v1207
        %v1213 = vsel %vm1210, %v1203, %v1205
        %v1214 = vsel %vm1210, %v1209, %v1203
        %vm1215 = vmand %vm621, %vm803
        %vm1216 = vmand %vm622, %vm804
        %v1217 = vsel %vm1215, 1, 0
        %v1218 = vsel %vm1216, 1, 0
        %v1219 = vperm.slane %v1217, 1
        %v1220 = vperm.slane %v1217, 5
        %v1221 = vperm.slane %v1218, 1
        %v1222 = vperm.slane %v1218, 5
        %v1223 = vperm.slane %v1219, 1
        %v1224 = vperm.slane %v1220, 1
        %v1225 = vperm.slane %v1221, 1
        %v1226 = vperm.slane %v1222, 1
        %vm1227 = vcmp.eq.s32.totalorder %v1223, 1
        %vm1228 = vcmp.eq.s32.totalorder %v1224, 1
        %vm1229 = vcmp.eq.s32.totalorder %v1225, 1
        %vm1230 = vcmp.eq.s32.totalorder %v1226, 1
        %v1231 = vsel %vm1227, %v1213, 0.0
        %v1232 = vsel %vm1228, %v1212, 0.0
        %v1233 = vsel %vm1229, %v1211, 0.0
        %v1234 = vsel %vm1230, %v1214, 0.0
        %v1239 = vrot.slane %v1231, 4
        %v1240 = vrot.slane %v1232, 4
        %v1241 = vrot.slane %v1233, 4
        %v1242 = vrot.slane %v1234, 4
        %1247 = vst [vmem:[#allocation2 + $0x100] sm:$0xf0] %v1239
        %1248 = vst [vmem:[#allocation2 + $0x108] sm:$0xf0] %v1240
        %1249 = vst [vmem:[#allocation2 + $0x110] sm:$0xf0] %v1241
        %1250 = vst [vmem:[#allocation2 + $0x118] sm:$0xf0] %v1242
        %vm1251 = vmand %vm1133, %vm535
        %vm1252 = vmand %vm1134, %vm536
        %v1253 = vsel %vm1251, 1, 0
        %v1254 = vsel %vm1252, 1, 0
        %v1255 = vperm.slane %v1253, 0
        %v1256 = vperm.slane %v1253, 4
        %v1257 = vperm.slane %v1254, 0
        %v1258 = vperm.slane %v1254, 4
        %v1259 = vperm.slane %v1255, 0
        %v1260 = vperm.slane %v1256, 0
        %v1261 = vperm.slane %v1257, 0
        %v1262 = vperm.slane %v1258, 0
        %vm1263 = vcmp.eq.s32.totalorder %v1259, 1
        %vm1264 = vcmp.eq.s32.totalorder %v1260, 1
        %vm1265 = vcmp.eq.s32.totalorder %v1261, 1
        %vm1266 = vcmp.eq.s32.totalorder %v1262, 1
        %v1267 = vsel %vm1263, %v517, 0.0
        %v1268 = vsel %vm1264, %v516, 0.0
        %v1269 = vsel %vm1265, %v515, 0.0
        %v1270 = vsel %vm1266, %v518, 0.0
        %1271 = vst [vmem:[#allocation2 + $0x120] sm:$0xf] %v1267
        %1272 = vst [vmem:[#allocation2 + $0x128] sm:$0xf] %v1268
        %1273 = vst [vmem:[#allocation2 + $0x130] sm:$0xf] %v1269
        %1274 = vst [vmem:[#allocation2 + $0x138] sm:$0xf] %v1270
        %v1275 = vperm.slane %v1135, 0
        %v1276 = vperm.slane %v1135, 4
        %v1277 = vperm.slane %v1136, 0
        %v1278 = vperm.slane %v1136, 4
        %v1279 = vperm.slane %v1275, 0
        %v1280 = vperm.slane %v1276, 0
        %v1281 = vperm.slane %v1277, 0
        %v1282 = vperm.slane %v1278, 0
        %vm1283 = vcmp.eq.s32.totalorder %v1279, 1
        %vm1284 = vcmp.eq.s32.totalorder %v1280, 1
        %vm1285 = vcmp.eq.s32.totalorder %v1281, 1
        %vm1286 = vcmp.eq.s32.totalorder %v1282, 1
        %v1287 = vsel %vm1283, %v572, 0.0
        %v1288 = vsel %vm1284, %v571, 0.0
        %v1289 = vsel %vm1285, %v570, 0.0
        %v1290 = vsel %vm1286, %v573, 0.0
        %v1295 = vrot.slane %v1287, 4
        %v1296 = vrot.slane %v1288, 4
        %v1297 = vrot.slane %v1289, 4
        %v1298 = vrot.slane %v1290, 4
        %1303 = vst [vmem:[#allocation2 + $0x120] sm:$0xf0] %v1295
        %1304 = vst [vmem:[#allocation2 + $0x128] sm:$0xf0] %v1296
        %1305 = vst [vmem:[#allocation2 + $0x130] sm:$0xf0] %v1297
        %1306 = vst [vmem:[#allocation2 + $0x138] sm:$0xf0] %v1298
        %vm1307 = vmand %vm1133, %vm629
        %vm1308 = vmand %vm1134, %vm630
        %v1309 = vsel %vm1307, 1, 0
        %v1310 = vsel %vm1308, 1, 0
        %v1311 = vperm.slane %v1309, 0
        %v1312 = vperm.slane %v1309, 4
        %v1313 = vperm.slane %v1310, 0
        %v1314 = vperm.slane %v1310, 4
        %v1315 = vperm.slane %v1311, 0
        %v1316 = vperm.slane %v1312, 0
        %v1317 = vperm.slane %v1313, 0
        %v1318 = vperm.slane %v1314, 0
        %vm1319 = vcmp.eq.s32.totalorder %v1315, 1
        %vm1320 = vcmp.eq.s32.totalorder %v1316, 1
        %vm1321 = vcmp.eq.s32.totalorder %v1317, 1
        %vm1322 = vcmp.eq.s32.totalorder %v1318, 1
        %v1323 = vsel %vm1319, %v619, 0.0
        %v1324 = vsel %vm1320, %v618, 0.0
        %v1325 = vsel %vm1321, %v617, 0.0
        %v1326 = vsel %vm1322, %v620, 0.0
        %1327 = vst [vmem:[#allocation2 + $0x140] sm:$0xf] %v1323
        %1328 = vst [vmem:[#allocation2 + $0x148] sm:$0xf] %v1324
        %1329 = vst [vmem:[#allocation2 + $0x150] sm:$0xf] %v1325
        %1330 = vst [vmem:[#allocation2 + $0x158] sm:$0xf] %v1326
        %vm1331 = vmand %vm621, %vm535
        %vm1332 = vmand %vm622, %vm536
        %v1333 = vsel %vm1331, 1, 0
        %v1334 = vsel %vm1332, 1, 0
        %v1335 = vperm.slane %v1333, 0
        %v1336 = vperm.slane %v1333, 4
        %v1337 = vperm.slane %v1334, 0
        %v1338 = vperm.slane %v1334, 4
        %v1339 = vperm.slane %v1335, 0
        %v1340 = vperm.slane %v1336, 0
        %v1341 = vperm.slane %v1337, 0
        %v1342 = vperm.slane %v1338, 0
        %vm1343 = vcmp.eq.s32.totalorder %v1339, 1
        %vm1344 = vcmp.eq.s32.totalorder %v1340, 1
        %vm1345 = vcmp.eq.s32.totalorder %v1341, 1
        %vm1346 = vcmp.eq.s32.totalorder %v1342, 1
        %v1347 = vsel %vm1343, %v666, 0.0
        %v1348 = vsel %vm1344, %v665, 0.0
        %v1349 = vsel %vm1345, %v664, 0.0
        %v1350 = vsel %vm1346, %v667, 0.0
        %v1355 = vrot.slane %v1347, 4
        %v1356 = vrot.slane %v1348, 4
        %v1357 = vrot.slane %v1349, 4
        %v1358 = vrot.slane %v1350, 4
        %1363 = vst [vmem:[#allocation2 + $0x140] sm:$0xf0] %v1355
        %1364 = vst [vmem:[#allocation2 + $0x148] sm:$0xf0] %v1356
        %1365 = vst [vmem:[#allocation2 + $0x150] sm:$0xf0] %v1357
        %1366 = vst [vmem:[#allocation2 + $0x158] sm:$0xf0] %v1358
        %v1367 = vperm.slane %v623, 0
        %v1368 = vperm.slane %v623, 4
        %v1369 = vperm.slane %v624, 0
        %v1370 = vperm.slane %v624, 4
        %v1371 = vperm.slane %v1367, 0
        %v1372 = vperm.slane %v1368, 0
        %v1373 = vperm.slane %v1369, 0
        %v1374 = vperm.slane %v1370, 0
        %vm1375 = vcmp.eq.s32.totalorder %v1371, 1
        %vm1376 = vcmp.eq.s32.totalorder %v1372, 1
        %vm1377 = vcmp.eq.s32.totalorder %v1373, 1
        %vm1378 = vcmp.eq.s32.totalorder %v1374, 1
        %v1379 = vsel %vm1375, %v715, 0.0
        %v1380 = vsel %vm1376, %v714, 0.0
        %v1381 = vsel %vm1377, %v713, 0.0
        %v1382 = vsel %vm1378, %v716, 0.0
        %1383 = vst [vmem:[#allocation2 + $0x160] sm:$0xf] %v1379
        %1384 = vst [vmem:[#allocation2 + $0x168] sm:$0xf] %v1380
        %1385 = vst [vmem:[#allocation2 + $0x170] sm:$0xf] %v1381
        %1386 = vst [vmem:[#allocation2 + $0x178] sm:$0xf] %v1382
        %vm1387 = vmand %vm621, %vm629
        %vm1388 = vmand %vm622, %vm630
        %v1389 = vsel %vm1387, 1, 0
        %v1390 = vsel %vm1388, 1, 0
        %v1391 = vperm.slane %v1389, 0
        %v1392 = vperm.slane %v1389, 4
        %v1393 = vperm.slane %v1390, 0
        %v1394 = vperm.slane %v1390, 4
        %v1395 = vperm.slane %v1391, 0
        %v1396 = vperm.slane %v1392, 0
        %v1397 = vperm.slane %v1393, 0
        %v1398 = vperm.slane %v1394, 0
        %vm1399 = vcmp.eq.s32.totalorder %v1395, 1
        %vm1400 = vcmp.eq.s32.totalorder %v1396, 1
        %vm1401 = vcmp.eq.s32.totalorder %v1397, 1
        %vm1402 = vcmp.eq.s32.totalorder %v1398, 1
        %v1403 = vsel %vm1399, %v748, 0.0
        %v1404 = vsel %vm1400, %v747, 0.0
        %v1405 = vsel %vm1401, %v746, 0.0
        %v1406 = vsel %vm1402, %v749, 0.0
        %v1411 = vrot.slane %v1403, 4
        %v1412 = vrot.slane %v1404, 4
        %v1413 = vrot.slane %v1405, 4
        %v1414 = vrot.slane %v1406, 4
        %1419 = vst [vmem:[#allocation2 + $0x160] sm:$0xf0] %v1411
        %1420 = vst [vmem:[#allocation2 + $0x168] sm:$0xf0] %v1412
        %1421 = vst [vmem:[#allocation2 + $0x170] sm:$0xf0] %v1413
        %1422 = vst [vmem:[#allocation2 + $0x178] sm:$0xf0] %v1414
        %vm1423 = vmand %vm1215, %vm535
        %vm1424 = vmand %vm1216, %vm536
        %v1425 = vsel %vm1423, 1, 0
        %v1426 = vsel %vm1424, 1, 0
        %v1427 = vperm.slane %v1425, 0
        %v1428 = vperm.slane %v1425, 4
        %v1429 = vperm.slane %v1426, 0
        %v1430 = vperm.slane %v1426, 4
        %v1431 = vperm.slane %v1427, 0
        %v1432 = vperm.slane %v1428, 0
        %v1433 = vperm.slane %v1429, 0
        %v1434 = vperm.slane %v1430, 0
        %vm1435 = vcmp.eq.s32.totalorder %v1431, 1
        %vm1436 = vcmp.eq.s32.totalorder %v1432, 1
        %vm1437 = vcmp.eq.s32.totalorder %v1433, 1
        %vm1438 = vcmp.eq.s32.totalorder %v1434, 1
        %v1439 = vsel %vm1435, %v797, 0.0
        %v1440 = vsel %vm1436, %v796, 0.0
        %v1441 = vsel %vm1437, %v795, 0.0
        %v1442 = vsel %vm1438, %v798, 0.0
        %1443 = vst [vmem:[#allocation2 + $0x180] sm:$0xf] %v1439
        %1444 = vst [vmem:[#allocation2 + $0x188] sm:$0xf] %v1440
        %1445 = vst [vmem:[#allocation2 + $0x190] sm:$0xf] %v1441
        %1446 = vst [vmem:[#allocation2 + $0x198] sm:$0xf] %v1442
        %v1447 = vperm.slane %v1217, 0
        %v1448 = vperm.slane %v1217, 4
        %v1449 = vperm.slane %v1218, 0
        %v1450 = vperm.slane %v1218, 4
        %v1451 = vperm.slane %v1447, 0
        %v1452 = vperm.slane %v1448, 0
        %v1453 = vperm.slane %v1449, 0
        %v1454 = vperm.slane %v1450, 0
        %vm1455 = vcmp.eq.s32.totalorder %v1451, 1
        %vm1456 = vcmp.eq.s32.totalorder %v1452, 1
        %vm1457 = vcmp.eq.s32.totalorder %v1453, 1
        %vm1458 = vcmp.eq.s32.totalorder %v1454, 1
        %v1459 = vsel %vm1455, %v842, 0.0
        %v1460 = vsel %vm1456, %v841, 0.0
        %v1461 = vsel %vm1457, %v840, 0.0
        %v1462 = vsel %vm1458, %v843, 0.0
        %v1467 = vrot.slane %v1459, 4
        %v1468 = vrot.slane %v1460, 4
        %v1469 = vrot.slane %v1461, 4
        %v1470 = vrot.slane %v1462, 4
        %1475 = vst [vmem:[#allocation2 + $0x180] sm:$0xf0] %v1467
        %1476 = vst [vmem:[#allocation2 + $0x188] sm:$0xf0] %v1468
        %1477 = vst [vmem:[#allocation2 + $0x190] sm:$0xf0] %v1469
        %1478 = vst [vmem:[#allocation2 + $0x198] sm:$0xf0] %v1470
        %vm1479 = vmand %vm1215, %vm629
        %vm1480 = vmand %vm1216, %vm630
        %v1481 = vsel %vm1479, 1, 0
        %v1482 = vsel %vm1480, 1, 0
        %v1483 = vperm.slane %v1481, 0
        %v1484 = vperm.slane %v1481, 4
        %v1485 = vperm.slane %v1482, 0
        %v1486 = vperm.slane %v1482, 4
        %v1487 = vperm.slane %v1483, 0
        %v1488 = vperm.slane %v1484, 0
        %v1489 = vperm.slane %v1485, 0
        %v1490 = vperm.slane %v1486, 0
        %vm1491 = vcmp.eq.s32.totalorder %v1487, 1
        %vm1492 = vcmp.eq.s32.totalorder %v1488, 1
        %vm1493 = vcmp.eq.s32.totalorder %v1489, 1
        %vm1494 = vcmp.eq.s32.totalorder %v1490, 1
        %v1495 = vsel %vm1491, %v889, 0.0
        %v1496 = vsel %vm1492, %v888, 0.0
        %v1497 = vsel %vm1493, %v887, 0.0
        %v1498 = vsel %vm1494, %v890, 0.0
        %1499 = vst [vmem:[#allocation2 + $0x1a0] sm:$0xf] %v1495
        %1500 = vst [vmem:[#allocation2 + $0x1a8] sm:$0xf] %v1496
        %1501 = vst [vmem:[#allocation2 + $0x1b0] sm:$0xf] %v1497
        %1502 = vst [vmem:[#allocation2 + $0x1b8] sm:$0xf] %v1498
        %v1503 = vld [vmem:[%s5] sm:$0xff]
        %v1504 = vld [vmem:[#allocation2] sm:$0xff]
        %v1505 = vld [vmem:[#allocation2 + $0x8] sm:$0xff]
        %v1506 = vld [vmem:[#allocation2 + $0x10] sm:$0xff]
        %v1507 = vld [vmem:[#allocation2 + $0x18] sm:$0xff]
        %v1508 = vld [vmem:[#allocation2 + $0x20] sm:$0xff]
        %v1509 = vld [vmem:[#allocation2 + $0x28] sm:$0xff]
        %v1510 = vld [vmem:[#allocation2 + $0x30] sm:$0xff]
        %v1511 = vld [vmem:[#allocation2 + $0x38] sm:$0xff]
        %v1512 = vld [vmem:[#allocation2 + $0x40] sm:$0xff]
        %v1513 = vld [vmem:[#allocation2 + $0x48] sm:$0xff]
        %v1514 = vld [vmem:[#allocation2 + $0x50] sm:$0xff]
        %v1515 = vld [vmem:[#allocation2 + $0x58] sm:$0xff]
        %v1516 = vld [vmem:[#allocation2 + $0x60] sm:$0xff]
        %v1517 = vld [vmem:[#allocation2 + $0x68] sm:$0xff]
        %v1518 = vld [vmem:[#allocation2 + $0x70] sm:$0xff]
        %v1519 = vld [vmem:[#allocation2 + $0x78] sm:$0xff]
        %v1520 = vld [vmem:[#allocation2 + $0x80] sm:$0xff]
        %v1521 = vld [vmem:[#allocation2 + $0x88] sm:$0xff]
        %v1522 = vld [vmem:[#allocation2 + $0x90] sm:$0xff]
        %v1523 = vld [vmem:[#allocation2 + $0x98] sm:$0xff]
        %v1524 = vld [vmem:[#allocation2 + $0xa0] sm:$0xff]
        %v1525 = vld [vmem:[#allocation2 + $0xa8] sm:$0xff]
        %v1526 = vld [vmem:[#allocation2 + $0xb0] sm:$0xff]
        %v1527 = vld [vmem:[#allocation2 + $0xb8] sm:$0xff]
        %v1528 = vld [vmem:[#allocation2 + $0xc0] sm:$0xff]
        %v1529 = vld [vmem:[#allocation2 + $0xc8] sm:$0xff]
        %v1530 = vld [vmem:[#allocation2 + $0xd0] sm:$0xff]
        %v1531 = vld [vmem:[#allocation2 + $0xd8] sm:$0xff]
        %v1532 = vld [vmem:[#allocation2 + $0xe0] sm:$0xff]
        %v1533 = vld [vmem:[#allocation2 + $0xe8] sm:$0xff]
        %v1534 = vld [vmem:[#allocation2 + $0xf0] sm:$0xff]
        %v1535 = vld [vmem:[#allocation2 + $0xf8] sm:$0xff]
        %v1536 = vld [vmem:[#allocation2 + $0x100] sm:$0xff]
        %v1537 = vld [vmem:[#allocation2 + $0x108] sm:$0xff]
        %v1538 = vld [vmem:[#allocation2 + $0x110] sm:$0xff]
        %v1539 = vld [vmem:[#allocation2 + $0x118] sm:$0xff]
        %v1540 = vld [vmem:[#allocation2 + $0x120] sm:$0xff]
        %v1541 = vld [vmem:[#allocation2 + $0x128] sm:$0xff]
        %v1542 = vld [vmem:[#allocation2 + $0x130] sm:$0xff]
        %v1543 = vld [vmem:[#allocation2 + $0x138] sm:$0xff]
        %v1544 = vld [vmem:[#allocation2 + $0x140] sm:$0xff]
        %v1545 = vld [vmem:[#allocation2 + $0x148] sm:$0xff]
        %v1546 = vld [vmem:[#allocation2 + $0x150] sm:$0xff]
        %v1547 = vld [vmem:[#allocation2 + $0x158] sm:$0xff]
        %v1548 = vld [vmem:[#allocation2 + $0x160] sm:$0xff]
        %v1549 = vld [vmem:[#allocation2 + $0x168] sm:$0xff]
        %v1550 = vld [vmem:[#allocation2 + $0x170] sm:$0xff]
        %v1551 = vld [vmem:[#allocation2 + $0x178] sm:$0xff]
        %v1552 = vld [vmem:[#allocation2 + $0x180] sm:$0xff]
        %v1553 = vld [vmem:[#allocation2 + $0x188] sm:$0xff]
        %v1554 = vld [vmem:[#allocation2 + $0x190] sm:$0xff]
        %v1555 = vld [vmem:[#allocation2 + $0x198] sm:$0xff]
        %v1556 = vld [vmem:[#allocation2 + $0x1a0] sm:$0xff]
        %v1557 = vld [vmem:[#allocation2 + $0x1a8] sm:$0xff]
        %v1558 = vld [vmem:[#allocation2 + $0x1b0] sm:$0xff]
        %v1559 = vld [vmem:[#allocation2 + $0x1b8] sm:$0xff]
        %v1560 = vld [vmem:[#allocation2 + $0x1c0] sm:$0xff]
        %v1561 = vld [vmem:[#allocation2 + $0x1c8] sm:$0xff]
        %v1562 = vld [vmem:[#allocation2 + $0x1d0] sm:$0xff]
        %v1563 = vld [vmem:[#allocation2 + $0x1d8] sm:$0xff]
        %v1564 = vld [vmem:[#allocation2 + $0x1e0] sm:$0xff]
        %v1565 = vld [vmem:[#allocation2 + $0x1e8] sm:$0xff]
        %v1566 = vld [vmem:[#allocation2 + $0x1f0] sm:$0xff]
        %v1567 = vld [vmem:[#allocation2 + $0x1f8] sm:$0xff]
        %v1568 = vld [vmem:[%s6] sm:$0xff]
        %1570 = vset.pattern.permute.xlu0 0
        %1571 = vperm.xlu0 %1570, %v1568
        %v1572 = vpop.permute.xlu0 %1571
        %1574 = vmatpush.msra.mxu0 %v1564
        %1575 = vmatpush.msra.mxu0 %v1560
        %1576 = vmatpush.msra.mxu0 %v1556
        %1577 = vmatpush.msra.mxu0 %v1552
        %1578 = vmatpush.msra.mxu0 %v1548
        %1579 = vmatpush.msra.mxu0 %v1544
        %1580 = vmatpush.msra.mxu0 %v1540
        %1581 = vmatpush.msra.mxu0 %v1536
        %1582 = vmatpush.msra.mxu0 %v1532
        %1583 = vmatpush.msra.mxu0 %v1528
        %1584 = vmatpush.msra.mxu0 %v1524
        %1585 = vmatpush.msra.mxu0 %v1520
        %1586 = vmatpush.msra.mxu0 %v1516
        %1587 = vmatpush.msra.mxu0 %v1512
        %1588 = vmatpush.msra.mxu0 %v1508
        %1589 = vmatpush.msra.mxu0 %v1504
        %1590 = vmatmul.f32.gmra.mxu0 %v1503
        %v1591 = vpop.f32.mrf.mxu0
        %v1592 = vadd.f32 %v1572, %v1591
        %1593 = vdwg.mxu0
        %1594 = vmatpush.msra.mxu0 %v1565
        %1595 = vmatpush.msra.mxu0 %v1561
        %1596 = vmatpush.msra.mxu0 %v1557
        %1597 = vmatpush.msra.mxu0 %v1553
        %1598 = vmatpush.msra.mxu0 %v1549
        %1599 = vmatpush.msra.mxu0 %v1545
        %1600 = vmatpush.msra.mxu0 %v1541
        %1601 = vmatpush.msra.mxu0 %v1537
        %1602 = vmatpush.msra.mxu0 %v1533
        %1603 = vmatpush.msra.mxu0 %v1529
        %1604 = vmatpush.msra.mxu0 %v1525
        %1605 = vmatpush.msra.mxu0 %v1521
        %1606 = vmatpush.msra.mxu0 %v1517
        %1607 = vmatpush.msra.mxu0 %v1513
        %1608 = vmatpush.msra.mxu0 %v1509
        %1609 = vmatpush.msra.mxu0 %v1505
        %1610 = vmatmul.f32.gmra.mxu0 %v1503
        %v1611 = vpop.f32.mrf.mxu0
        %v1612 = vadd.f32 %v1572, %v1611
        %1613 = vdwg.mxu0
        %1614 = vmatpush.msra.mxu0 %v1566
        %1615 = vmatpush.msra.mxu0 %v1562
        %1616 = vmatpush.msra.mxu0 %v1558
        %1617 = vmatpush.msra.mxu0 %v1554
        %1618 = vmatpush.msra.mxu0 %v1550
        %1619 = vmatpush.msra.mxu0 %v1546
        %1620 = vmatpush.msra.mxu0 %v1542
        %1621 = vmatpush.msra.mxu0 %v1538
        %1622 = vmatpush.msra.mxu0 %v1534
        %1623 = vmatpush.msra.mxu0 %v1530
        %1624 = vmatpush.msra.mxu0 %v1526
        %1625 = vmatpush.msra.mxu0 %v1522
        %1626 = vmatpush.msra.mxu0 %v1518
        %1627 = vmatpush.msra.mxu0 %v1514
        %1628 = vmatpush.msra.mxu0 %v1510
        %1629 = vmatpush.msra.mxu0 %v1506
        %1630 = vmatmul.f32.gmra.mxu0 %v1503
        %v1631 = vpop.f32.mrf.mxu0
        %v1632 = vadd.f32 %v1572, %v1631
        %1633 = vdwg.mxu0
        %1634 = vmatpush.msra.mxu0 %v1567
        %1635 = vmatpush.msra.mxu0 %v1563
        %1636 = vmatpush.msra.mxu0 %v1559
        %1637 = vmatpush.msra.mxu0 %v1555
        %1638 = vmatpush.msra.mxu0 %v1551
        %1639 = vmatpush.msra.mxu0 %v1547
        %1640 = vmatpush.msra.mxu0 %v1543
        %1641 = vmatpush.msra.mxu0 %v1539
        %1642 = vmatpush.msra.mxu0 %v1535
        %1643 = vmatpush.msra.mxu0 %v1531
        %1644 = vmatpush.msra.mxu0 %v1527
        %1645 = vmatpush.msra.mxu0 %v1523
        %1646 = vmatpush.msra.mxu0 %v1519
        %1647 = vmatpush.msra.mxu0 %v1515
        %1648 = vmatpush.msra.mxu0 %v1511
        %1649 = vmatpush.msra.mxu0 %v1507
        %1650 = vmatmul.f32.gmra.mxu0 %v1503
        %v1651 = vpop.f32.mrf.mxu0
        %v1652 = vadd.f32 %v1572, %v1651
        %1653 = vdwg.mxu0
        %1654 = vst [vmem:[%s338] sm:$0xff] %v1592
        %1655 = vst [vmem:[%s338 + $0x8] sm:$0xff] %v1612
        %1656 = vst [vmem:[%s338 + $0x10] sm:$0xff] %v1632
        %1657 = vst [vmem:[%s338 + $0x18] sm:$0xff] %v1652
        %s1658 = sand.u32 %s207, 1
        %s1659 = scalar_lea.sflag [#allocation5], %s1658
        %s1660 = sand.u32 %s207, 1
        %s1661 = smul.addr %s1660, 32
        %s1662 = scalar_lea.vmem [#allocation8], %s1661
        // Predicated region
        $region61: #{tpu_custom_call.1} parent=51 // pred_check
          %p1663 = pneg %p217
        $region62: #{tpu_custom_call.1} parent=51 // pred_check_branch
          %1665 = sbr.rel (%p1663) target = $region64
        $region63: #{tpu_custom_call.1} parent=51 // pred_region
          %1667 = vsyncadd %s1659, 0
          %s1668 = smul.addr %s26, 4
          %s1669 = smul.addr %s1668, 8
          %s1670 = scalar_lea.hbm %s8, %s1669
          %s1672 = sshll.u32 %s1662, 4
          %s1673 = int_to_ptr.vmem [resolvable:$true] %s1672
          %s1674 = sshll.u32 %s1670, 4
          %s1675 = int_to_ptr.hbm [resolvable:$true] %s1674
          %1677 = dma.vmem_to_hbm [thread:$0]  %s1673, 512, %s1675, %s1659
        $region64: #{tpu_custom_call.1} parent=51 // pred_fallthru
          _
      $region52: #{tpu_custom_call.1} parent=5 // pred_fallthru
        _
      %p1678 = scmp.le.s32.totalorder 2, %s21
      // Predicated region
      $region65: #{tpu_custom_call.1} parent=5 // pred_check
        %p1679 = pneg %p1678
      $region66: #{tpu_custom_call.1} parent=5 // pred_check_branch
        %1681 = sbr.rel (%p1679) target = $region68
      $region67: #{tpu_custom_call.1} parent=5 // pred_region
        %s1682 = ssub.s32 %s21, 2
        // Predicated region
        $region69: #{tpu_custom_call.1} parent=67 // pred_check
          %p1683 = pneg %p223
        $region70: #{tpu_custom_call.1} parent=67 // pred_check_branch
          %1685 = sbr.rel (%p1683) target = $region72
        $region71: #{tpu_custom_call.1} parent=67 // pred_region
          %s1686 = sand.u32 %s208, 1
          %s1687 = scalar_lea.sflag [#allocation5], %s1686
          %s1688 = sand.u32 %s208, 1
          %s1689 = smul.addr %s1688, 32
          %s1690 = scalar_lea.vmem [#allocation8], %s1689
          %1692 = dma.done %s1687, 512
        $region72: #{tpu_custom_call.1} parent=67 // pred_fallthru
          _
      $region68: #{tpu_custom_call.1} parent=5 // pred_fallthru
        _
    $region6: #{tpu_custom_call.1} parent=1 // loop_footer
      %s25 = sadd.s32 1, %s21
    $region7: #{tpu_custom_call.1} parent=1 // loop_footer_branch
      %20 = sbr.rel target = $region3
    $region8: #{tpu_custom_call.1} parent=1 // loop_exit
      _
    %1693 = vsyncpa [#allocation4], 1
    %s1694 = scalar_lea.sflag [#allocation4], 1
    %1695 = vsyncpa %s1694, 1
    %1696 = vsyncpa [#allocation7], 1
    %1697 = vsyncpa [#allocation5], 1
    %s1698 = scalar_lea.sflag [#allocation5], 1
    %1699 = vsyncpa %s1698, 1

</llo_original>
